<compile_context>
chip_gen: v7x
topology: tpu7x:2x2x1
jax: 0.10.0
libtpu: 0.0.40
codegen_flags: <defaults>
</compile_context>

<pallas_src>
import jax
import jax.numpy as jnp
from jax.experimental import pallas as pl
from jax.experimental.pallas import tpu as pltpu


def lstm_head_kernel(x_ref, wih_ref, whh_ref, b_ref, wout_ref, bout_ref, out_ref):
    """One batch tile: hoisted input projection + unrolled LSTM recurrence + Linear head.

    x_ref:    (Bt, T, I)  batch-first input tile (bf16)
    wih_ref:  (I, 4H)     fused input->gate weights, gate order [i|f|g|o] (bf16)
    whh_ref:  (H, 4H)     fused hidden->gate weights (bf16)
    b_ref:    (1, 4H)     fused biases b_ih + b_hh (f32)
    wout_ref: (H, O)      output projection (bf16)
    bout_ref: (1, O)      output bias (f32)
    out_ref:  (Bt, O)     result (f32)
    """
    Bt, T, I = x_ref.shape
    H4 = whh_ref.shape[1]
    H = H4 // 4

    # ---- Phase 1: hoisted input projection (not on the recurrent dependence chain).
    # One lane-dense GEMM over all timesteps; bias folded in once.
    x_flat = x_ref[...].reshape(Bt * T, I)                                   # (Bt*T, I) bf16
    xw = jnp.dot(x_flat, wih_ref[...], preferred_element_type=jnp.float32)   # (Bt*T, 4H) f32
    xw = xw.reshape(Bt, T, H4) + b_ref[...]                                  # (Bt, T, 4H) f32

    whh = whh_ref[...]                                                       # (H, 4H) bf16, resident

    # ---- Phase 2: recurrence. Fully unrolled (T small & static); one fused bf16 MXU
    # matmul per step, all elementwise gate math in f32.
    h = jnp.zeros((Bt, H), jnp.float32)
    c = jnp.zeros((Bt, H), jnp.float32)
    for t in range(T):
        gates = xw[:, t, :] + jnp.dot(h.astype(whh.dtype), whh,
                                      preferred_element_type=jnp.float32)    # (Bt, 4H) f32
        i_g = jax.nn.sigmoid(gates[:, 0 * H:1 * H])
        f_g = jax.nn.sigmoid(gates[:, 1 * H:2 * H])
        g_g = jnp.tanh(      gates[:, 2 * H:3 * H])
        o_g = jax.nn.sigmoid(gates[:, 3 * H:4 * H])
        c = f_g * c + i_g * g_g
        h = o_g * jnp.tanh(c)

    # ---- Phase 3: output projection on the final hidden state (off the per-step path).
    out_ref[...] = (jnp.dot(h.astype(wout_ref.dtype), wout_ref[...],
                            preferred_element_type=jnp.float32)
                    + bout_ref[...]).astype(out_ref.dtype)


def prediction_module_forward(x, params, *, batch_tile=8):
    """x: (B, T, I) batch-first (PyTorch convention). Returns (B, O) in f32."""
    wih, whh, b, wout, bout = (params["wih"], params["whh"], params["b"],
                               params["wout"], params["bout"])
    B, T, I = x.shape
    H4 = wih.shape[1]
    H = H4 // 4
    O = wout.shape[1]

    # bf16 activations into the MXU (weights already bf16); accumulation stays f32.
    x = x.astype(wih.dtype)

    # Pad batch to a multiple of the tile (>=8 fills vreg sublanes); padded rows discarded.
    Bp = pl.cdiv(B, batch_tile) * batch_tile
    if Bp != B:
        x = jnp.pad(x, ((0, Bp - B), (0, 0), (0, 0)))

    resident = lambda i: (0, 0)  # weights: same block every grid step -> stay in VMEM

    out = pl.pallas_call(
        lstm_head_kernel,
        out_shape=jax.ShapeDtypeStruct((Bp, O), jnp.float32),
        grid_spec=pltpu.PrefetchScalarGridSpec(
            num_scalar_prefetch=0,
            grid=(Bp // batch_tile,),
            in_specs=[
                pl.BlockSpec((batch_tile, T, I), lambda i: (i, 0, 0)),  # x batch tiles (pipelined)
                pl.BlockSpec((I, H4), resident),                        # Wih
                pl.BlockSpec((H, H4), resident),                        # Whh
                pl.BlockSpec((1, H4), resident),                        # fused bias
                pl.BlockSpec((H, O), resident),                         # Wout
                pl.BlockSpec((1, O), resident),                         # bout
            ],
            out_specs=pl.BlockSpec((batch_tile, O), lambda i: (i, 0)),
        ),
        compiler_params=pltpu.CompilerParams(
            dimension_semantics=("parallel",),          # shards batch tiles across TCs (v7x)
            vmem_limit_bytes=32 * 1024 * 1024,          # explicit budget, fits v7x's 64 MiB
        ),
    )(x, wih, whh, b, wout, bout)
    return out[:B]


def init_params(key, input_size, hidden_size, output_size, dtype=jnp.bfloat16):
    """Deterministic synthetic parameters: PyTorch-shaped, then fused/pre-transposed."""
    k = jax.random.split(key, 6)
    s = 1.0 / jnp.sqrt(hidden_size)
    # PyTorch-native shapes (rows ordered [i, f, g, o]).
    w_ih = jax.random.uniform(k[0], (4 * hidden_size, input_size), jnp.float32, -s, s)
    w_hh = jax.random.uniform(k[1], (4 * hidden_size, hidden_size), jnp.float32, -s, s)
    b_ih = jax.random.uniform(k[2], (4 * hidden_size,), jnp.float32, -s, s)
    b_hh = jax.random.uniform(k[3], (4 * hidden_size,), jnp.float32, -s, s)
    w_out = jax.random.uniform(k[4], (output_size, hidden_size), jnp.float32, -s, s)
    b_out = jax.random.uniform(k[5], (output_size,), jnp.float32, -s, s)
    # Fused, MXU-friendly kernel layouts.
    wih = w_ih.T.astype(dtype)                              # (I, 4H), columns = [i|f|g|o]
    whh = w_hh.T.astype(dtype)                              # (H, 4H)
    b = (b_ih + b_hh).reshape(1, 4 * hidden_size)           # (1, 4H), f32
    wout = w_out.T.astype(dtype)                            # (H, O)
    bout = b_out.reshape(1, output_size)                    # (1, O), f32
    return dict(wih=wih, whh=whh, b=b, wout=wout, bout=bout)


def reference_forward(x, params):
    """Pure-JAX reference of the PyTorch LSTM + Linear semantics (mirrors the kernel's
    mixed precision: bf16 matmul operands, f32 accumulation/state)."""
    wih, whh, b, wout, bout = (params["wih"], params["whh"], params["b"],
                               params["wout"], params["bout"])
    B, T, I = x.shape
    H = whh.shape[0]
    x = x.astype(wih.dtype)
    h = jnp.zeros((B, H), jnp.float32)
    c = jnp.zeros((B, H), jnp.float32)
    for t in range(T):
        gates = (jnp.dot(x[:, t, :], wih, preferred_element_type=jnp.float32)
                 + jnp.dot(h.astype(whh.dtype), whh, preferred_element_type=jnp.float32)
                 + b)
        i_g = jax.nn.sigmoid(gates[:, 0 * H:1 * H])
        f_g = jax.nn.sigmoid(gates[:, 1 * H:2 * H])
        g_g = jnp.tanh(      gates[:, 2 * H:3 * H])
        o_g = jax.nn.sigmoid(gates[:, 3 * H:4 * H])
        c = f_g * c + i_g * g_g
        h = o_g * jnp.tanh(c)
    return (jnp.dot(h.astype(wout.dtype), wout, preferred_element_type=jnp.float32)
            + bout)


if __name__ == "__main__":
    batch, seq, input_size, hidden_size, output_size = 2, 8, 4, 32, 8

    key = jax.random.PRNGKey(0)
    kx, kp = jax.random.split(key)
    x = jax.random.normal(kx, (batch, seq, input_size), jnp.float32)
    params = init_params(kp, input_size, hidden_size, output_size)

    y = prediction_module_forward(x, params)
    y = jax.block_until_ready(y)

    y_ref = reference_forward(x, params)
    assert y.shape == (batch, output_size)
    # bf16 matmul operands => mixed-precision tolerance (reference mirrors the same casts).
    assert jnp.allclose(y, y_ref, atol=1e-2, rtol=1e-2), "mismatch vs reference"

    print("KERNEL_OK")
</pallas_src>

<mosaic_0001>
module attributes {stable_mosaic.version = 11 : i64} {
  func.func @lstm_head_kernel(%arg0: i32, %arg1: memref<8x8x4xbf16, #tpu.memory_space<vmem>>, %arg2: memref<4x128xbf16, #tpu.memory_space<vmem>>, %arg3: memref<32x128xbf16, #tpu.memory_space<vmem>>, %arg4: memref<1x128xf32, #tpu.memory_space<vmem>>, %arg5: memref<32x8xbf16, #tpu.memory_space<vmem>>, %arg6: memref<1x8xf32, #tpu.memory_space<vmem>>, %arg7: memref<8x8xf32, #tpu.memory_space<vmem>>) attributes {dimension_semantics = [#tpu.dimension_semantics<parallel>], iteration_bounds = array<i64: 1>, scalar_prefetch = 0 : i64, scratch_operands = 0 : i64, tpu.core_type = #tpu.core_type<tc>, window_params = [{transform_indices = @transform_0, window_bounds = array<i64: 8, 8, 4>}, {pipeline_mode = #tpu.pipeline_mode<synchronous>, transform_indices = @transform_1, window_bounds = array<i64: 4, 128>}, {pipeline_mode = #tpu.pipeline_mode<synchronous>, transform_indices = @transform_2, window_bounds = array<i64: 32, 128>}, {pipeline_mode = #tpu.pipeline_mode<synchronous>, transform_indices = @transform_3, window_bounds = array<i64: 1, 128>}, {pipeline_mode = #tpu.pipeline_mode<synchronous>, transform_indices = @transform_4, window_bounds = array<i64: 32, 8>}, {pipeline_mode = #tpu.pipeline_mode<synchronous>, transform_indices = @transform_5, window_bounds = array<i64: 1, 8>}, {transform_indices = @transform_6, window_bounds = array<i64: 8, 8>}]} {
    %c0 = arith.constant 0 : index
    %c0_0 = arith.constant 0 : index
    %c0_1 = arith.constant 0 : index
    %0 = vector.load %arg1[%c0, %c0_0, %c0_1] : memref<8x8x4xbf16, #tpu.memory_space<vmem>>, vector<8x8x4xbf16>
    %1 = vector.shape_cast %0 : vector<8x8x4xbf16> to vector<64x4xbf16>
    %c0_2 = arith.constant 0 : index
    %c0_3 = arith.constant 0 : index
    %2 = vector.load %arg2[%c0_2, %c0_3] : memref<4x128xbf16, #tpu.memory_space<vmem>>, vector<4x128xbf16>
    %cst = arith.constant dense<0.000000e+00> : vector<64x128xf32>
    %3 = tpu.matmul %1, %2, %cst {dimension_numbers = #tpu.dot_dimension_numbers<[1], [0], [0], [1], [0, 0, 1, 1], [], []>} : vector<64x4xbf16>, vector<4x128xbf16>, vector<64x128xf32> -> vector<64x128xf32>
    %4 = vector.shape_cast %3 : vector<64x128xf32> to vector<8x8x128xf32>
    %c0_4 = arith.constant 0 : index
    %c0_5 = arith.constant 0 : index
    %5 = vector.load %arg4[%c0_4, %c0_5] : memref<1x128xf32, #tpu.memory_space<vmem>>, vector<1x128xf32>
    %6 = vector.shape_cast %5 : vector<1x128xf32> to vector<1x1x128xf32>
    %7 = vector.broadcast %6 : vector<1x1x128xf32> to vector<8x8x128xf32>
    %8 = arith.addf %4, %7 : vector<8x8x128xf32>
    %c0_6 = arith.constant 0 : index
    %c0_7 = arith.constant 0 : index
    %9 = vector.load %arg3[%c0_6, %c0_7] : memref<32x128xbf16, #tpu.memory_space<vmem>>, vector<32x128xbf16>
    %cst_8 = arith.constant 0.000000e+00 : f32
    %10 = vector.broadcast %cst_8 : f32 to vector<8x32xf32>
    %cst_9 = arith.constant 0.000000e+00 : f32
    %11 = vector.broadcast %cst_9 : f32 to vector<8x32xf32>
    %12 = vector.extract_strided_slice %8 {offsets = [0, 0, 0], sizes = [8, 1, 128], strides = [1, 1, 1]} : vector<8x8x128xf32> to vector<8x1x128xf32>
    %13 = vector.shape_cast %12 : vector<8x1x128xf32> to vector<8x128xf32>
    %14 = arith.truncf %10 : vector<8x32xf32> to vector<8x32xbf16>
    %cst_10 = arith.constant dense<0.000000e+00> : vector<8x128xf32>
    %15 = tpu.matmul %14, %9, %cst_10 {dimension_numbers = #tpu.dot_dimension_numbers<[1], [0], [0], [1], [0, 0, 1, 1], [], []>} : vector<8x32xbf16>, vector<32x128xbf16>, vector<8x128xf32> -> vector<8x128xf32>
    %16 = arith.addf %13, %15 : vector<8x128xf32>
    %17 = vector.extract_strided_slice %16 {offsets = [0, 0], sizes = [8, 32], strides = [1, 1]} : vector<8x128xf32> to vector<8x32xf32>
    %18 = arith.negf %17 : vector<8x32xf32>
    %19 = math.exp %18 : vector<8x32xf32>
    %cst_11 = arith.constant 1.000000e+00 : f32
    %20 = vector.broadcast %cst_11 : f32 to vector<8x32xf32>
    %21 = arith.addf %20, %19 : vector<8x32xf32>
    %22 = arith.divf %20, %21 : vector<8x32xf32>
    %23 = vector.extract_strided_slice %16 {offsets = [0, 32], sizes = [8, 32], strides = [1, 1]} : vector<8x128xf32> to vector<8x32xf32>
    %24 = arith.negf %23 : vector<8x32xf32>
    %25 = math.exp %24 : vector<8x32xf32>
    %cst_12 = arith.constant 1.000000e+00 : f32
    %26 = vector.broadcast %cst_12 : f32 to vector<8x32xf32>
    %27 = arith.addf %26, %25 : vector<8x32xf32>
    %28 = arith.divf %26, %27 : vector<8x32xf32>
    %29 = vector.extract_strided_slice %16 {offsets = [0, 64], sizes = [8, 32], strides = [1, 1]} : vector<8x128xf32> to vector<8x32xf32>
    %30 = math.tanh %29 : vector<8x32xf32>
    %31 = vector.extract_strided_slice %16 {offsets = [0, 96], sizes = [8, 32], strides = [1, 1]} : vector<8x128xf32> to vector<8x32xf32>
    %32 = arith.negf %31 : vector<8x32xf32>
    %33 = math.exp %32 : vector<8x32xf32>
    %cst_13 = arith.constant 1.000000e+00 : f32
    %34 = vector.broadcast %cst_13 : f32 to vector<8x32xf32>
    %35 = arith.addf %34, %33 : vector<8x32xf32>
    %36 = arith.divf %34, %35 : vector<8x32xf32>
    %37 = arith.mulf %28, %11 : vector<8x32xf32>
    %38 = arith.mulf %22, %30 : vector<8x32xf32>
    %39 = arith.addf %37, %38 : vector<8x32xf32>
    %40 = math.tanh %39 : vector<8x32xf32>
    %41 = arith.mulf %36, %40 : vector<8x32xf32>
    %42 = vector.extract_strided_slice %8 {offsets = [0, 1, 0], sizes = [8, 1, 128], strides = [1, 1, 1]} : vector<8x8x128xf32> to vector<8x1x128xf32>
    %43 = vector.shape_cast %42 : vector<8x1x128xf32> to vector<8x128xf32>
    %44 = arith.truncf %41 : vector<8x32xf32> to vector<8x32xbf16>
    %cst_14 = arith.constant dense<0.000000e+00> : vector<8x128xf32>
    %45 = tpu.matmul %44, %9, %cst_14 {dimension_numbers = #tpu.dot_dimension_numbers<[1], [0], [0], [1], [0, 0, 1, 1], [], []>} : vector<8x32xbf16>, vector<32x128xbf16>, vector<8x128xf32> -> vector<8x128xf32>
    %46 = arith.addf %43, %45 : vector<8x128xf32>
    %47 = vector.extract_strided_slice %46 {offsets = [0, 0], sizes = [8, 32], strides = [1, 1]} : vector<8x128xf32> to vector<8x32xf32>
    %48 = arith.negf %47 : vector<8x32xf32>
    %49 = math.exp %48 : vector<8x32xf32>
    %cst_15 = arith.constant 1.000000e+00 : f32
    %50 = vector.broadcast %cst_15 : f32 to vector<8x32xf32>
    %51 = arith.addf %50, %49 : vector<8x32xf32>
    %52 = arith.divf %50, %51 : vector<8x32xf32>
    %53 = vector.extract_strided_slice %46 {offsets = [0, 32], sizes = [8, 32], strides = [1, 1]} : vector<8x128xf32> to vector<8x32xf32>
    %54 = arith.negf %53 : vector<8x32xf32>
    %55 = math.exp %54 : vector<8x32xf32>
    %cst_16 = arith.constant 1.000000e+00 : f32
    %56 = vector.broadcast %cst_16 : f32 to vector<8x32xf32>
    %57 = arith.addf %56, %55 : vector<8x32xf32>
    %58 = arith.divf %56, %57 : vector<8x32xf32>
    %59 = vector.extract_strided_slice %46 {offsets = [0, 64], sizes = [8, 32], strides = [1, 1]} : vector<8x128xf32> to vector<8x32xf32>
    %60 = math.tanh %59 : vector<8x32xf32>
    %61 = vector.extract_strided_slice %46 {offsets = [0, 96], sizes = [8, 32], strides = [1, 1]} : vector<8x128xf32> to vector<8x32xf32>
    %62 = arith.negf %61 : vector<8x32xf32>
    %63 = math.exp %62 : vector<8x32xf32>
    %cst_17 = arith.constant 1.000000e+00 : f32
    %64 = vector.broadcast %cst_17 : f32 to vector<8x32xf32>
    %65 = arith.addf %64, %63 : vector<8x32xf32>
    %66 = arith.divf %64, %65 : vector<8x32xf32>
    %67 = arith.mulf %58, %39 : vector<8x32xf32>
    %68 = arith.mulf %52, %60 : vector<8x32xf32>
    %69 = arith.addf %67, %68 : vector<8x32xf32>
    %70 = math.tanh %69 : vector<8x32xf32>
    %71 = arith.mulf %66, %70 : vector<8x32xf32>
    %72 = vector.extract_strided_slice %8 {offsets = [0, 2, 0], sizes = [8, 1, 128], strides = [1, 1, 1]} : vector<8x8x128xf32> to vector<8x1x128xf32>
    %73 = vector.shape_cast %72 : vector<8x1x128xf32> to vector<8x128xf32>
    %74 = arith.truncf %71 : vector<8x32xf32> to vector<8x32xbf16>
    %cst_18 = arith.constant dense<0.000000e+00> : vector<8x128xf32>
    %75 = tpu.matmul %74, %9, %cst_18 {dimension_numbers = #tpu.dot_dimension_numbers<[1], [0], [0], [1], [0, 0, 1, 1], [], []>} : vector<8x32xbf16>, vector<32x128xbf16>, vector<8x128xf32> -> vector<8x128xf32>
    %76 = arith.addf %73, %75 : vector<8x128xf32>
    %77 = vector.extract_strided_slice %76 {offsets = [0, 0], sizes = [8, 32], strides = [1, 1]} : vector<8x128xf32> to vector<8x32xf32>
    %78 = arith.negf %77 : vector<8x32xf32>
    %79 = math.exp %78 : vector<8x32xf32>
    %cst_19 = arith.constant 1.000000e+00 : f32
    %80 = vector.broadcast %cst_19 : f32 to vector<8x32xf32>
    %81 = arith.addf %80, %79 : vector<8x32xf32>
    %82 = arith.divf %80, %81 : vector<8x32xf32>
    %83 = vector.extract_strided_slice %76 {offsets = [0, 32], sizes = [8, 32], strides = [1, 1]} : vector<8x128xf32> to vector<8x32xf32>
    %84 = arith.negf %83 : vector<8x32xf32>
    %85 = math.exp %84 : vector<8x32xf32>
    %cst_20 = arith.constant 1.000000e+00 : f32
    %86 = vector.broadcast %cst_20 : f32 to vector<8x32xf32>
    %87 = arith.addf %86, %85 : vector<8x32xf32>
    %88 = arith.divf %86, %87 : vector<8x32xf32>
    %89 = vector.extract_strided_slice %76 {offsets = [0, 64], sizes = [8, 32], strides = [1, 1]} : vector<8x128xf32> to vector<8x32xf32>
    %90 = math.tanh %89 : vector<8x32xf32>
    %91 = vector.extract_strided_slice %76 {offsets = [0, 96], sizes = [8, 32], strides = [1, 1]} : vector<8x128xf32> to vector<8x32xf32>
    %92 = arith.negf %91 : vector<8x32xf32>
    %93 = math.exp %92 : vector<8x32xf32>
    %cst_21 = arith.constant 1.000000e+00 : f32
    %94 = vector.broadcast %cst_21 : f32 to vector<8x32xf32>
    %95 = arith.addf %94, %93 : vector<8x32xf32>
    %96 = arith.divf %94, %95 : vector<8x32xf32>
    %97 = arith.mulf %88, %69 : vector<8x32xf32>
    %98 = arith.mulf %82, %90 : vector<8x32xf32>
    %99 = arith.addf %97, %98 : vector<8x32xf32>
    %100 = math.tanh %99 : vector<8x32xf32>
    %101 = arith.mulf %96, %100 : vector<8x32xf32>
    %102 = vector.extract_strided_slice %8 {offsets = [0, 3, 0], sizes = [8, 1, 128], strides = [1, 1, 1]} : vector<8x8x128xf32> to vector<8x1x128xf32>
    %103 = vector.shape_cast %102 : vector<8x1x128xf32> to vector<8x128xf32>
    %104 = arith.truncf %101 : vector<8x32xf32> to vector<8x32xbf16>
    %cst_22 = arith.constant dense<0.000000e+00> : vector<8x128xf32>
    %105 = tpu.matmul %104, %9, %cst_22 {dimension_numbers = #tpu.dot_dimension_numbers<[1], [0], [0], [1], [0, 0, 1, 1], [], []>} : vector<8x32xbf16>, vector<32x128xbf16>, vector<8x128xf32> -> vector<8x128xf32>
    %106 = arith.addf %103, %105 : vector<8x128xf32>
    %107 = vector.extract_strided_slice %106 {offsets = [0, 0], sizes = [8, 32], strides = [1, 1]} : vector<8x128xf32> to vector<8x32xf32>
    %108 = arith.negf %107 : vector<8x32xf32>
    %109 = math.exp %108 : vector<8x32xf32>
    %cst_23 = arith.constant 1.000000e+00 : f32
    %110 = vector.broadcast %cst_23 : f32 to vector<8x32xf32>
    %111 = arith.addf %110, %109 : vector<8x32xf32>
    %112 = arith.divf %110, %111 : vector<8x32xf32>
    %113 = vector.extract_strided_slice %106 {offsets = [0, 32], sizes = [8, 32], strides = [1, 1]} : vector<8x128xf32> to vector<8x32xf32>
    %114 = arith.negf %113 : vector<8x32xf32>
    %115 = math.exp %114 : vector<8x32xf32>
    %cst_24 = arith.constant 1.000000e+00 : f32
    %116 = vector.broadcast %cst_24 : f32 to vector<8x32xf32>
    %117 = arith.addf %116, %115 : vector<8x32xf32>
    %118 = arith.divf %116, %117 : vector<8x32xf32>
    %119 = vector.extract_strided_slice %106 {offsets = [0, 64], sizes = [8, 32], strides = [1, 1]} : vector<8x128xf32> to vector<8x32xf32>
    %120 = math.tanh %119 : vector<8x32xf32>
    %121 = vector.extract_strided_slice %106 {offsets = [0, 96], sizes = [8, 32], strides = [1, 1]} : vector<8x128xf32> to vector<8x32xf32>
    %122 = arith.negf %121 : vector<8x32xf32>
    %123 = math.exp %122 : vector<8x32xf32>
    %cst_25 = arith.constant 1.000000e+00 : f32
    %124 = vector.broadcast %cst_25 : f32 to vector<8x32xf32>
    %125 = arith.addf %124, %123 : vector<8x32xf32>
    %126 = arith.divf %124, %125 : vector<8x32xf32>
    %127 = arith.mulf %118, %99 : vector<8x32xf32>
    %128 = arith.mulf %112, %120 : vector<8x32xf32>
    %129 = arith.addf %127, %128 : vector<8x32xf32>
    %130 = math.tanh %129 : vector<8x32xf32>
    %131 = arith.mulf %126, %130 : vector<8x32xf32>
    %132 = vector.extract_strided_slice %8 {offsets = [0, 4, 0], sizes = [8, 1, 128], strides = [1, 1, 1]} : vector<8x8x128xf32> to vector<8x1x128xf32>
    %133 = vector.shape_cast %132 : vector<8x1x128xf32> to vector<8x128xf32>
    %134 = arith.truncf %131 : vector<8x32xf32> to vector<8x32xbf16>
    %cst_26 = arith.constant dense<0.000000e+00> : vector<8x128xf32>
    %135 = tpu.matmul %134, %9, %cst_26 {dimension_numbers = #tpu.dot_dimension_numbers<[1], [0], [0], [1], [0, 0, 1, 1], [], []>} : vector<8x32xbf16>, vector<32x128xbf16>, vector<8x128xf32> -> vector<8x128xf32>
    %136 = arith.addf %133, %135 : vector<8x128xf32>
    %137 = vector.extract_strided_slice %136 {offsets = [0, 0], sizes = [8, 32], strides = [1, 1]} : vector<8x128xf32> to vector<8x32xf32>
    %138 = arith.negf %137 : vector<8x32xf32>
    %139 = math.exp %138 : vector<8x32xf32>
    %cst_27 = arith.constant 1.000000e+00 : f32
    %140 = vector.broadcast %cst_27 : f32 to vector<8x32xf32>
    %141 = arith.addf %140, %139 : vector<8x32xf32>
    %142 = arith.divf %140, %141 : vector<8x32xf32>
    %143 = vector.extract_strided_slice %136 {offsets = [0, 32], sizes = [8, 32], strides = [1, 1]} : vector<8x128xf32> to vector<8x32xf32>
    %144 = arith.negf %143 : vector<8x32xf32>
    %145 = math.exp %144 : vector<8x32xf32>
    %cst_28 = arith.constant 1.000000e+00 : f32
    %146 = vector.broadcast %cst_28 : f32 to vector<8x32xf32>
    %147 = arith.addf %146, %145 : vector<8x32xf32>
    %148 = arith.divf %146, %147 : vector<8x32xf32>
    %149 = vector.extract_strided_slice %136 {offsets = [0, 64], sizes = [8, 32], strides = [1, 1]} : vector<8x128xf32> to vector<8x32xf32>
    %150 = math.tanh %149 : vector<8x32xf32>
    %151 = vector.extract_strided_slice %136 {offsets = [0, 96], sizes = [8, 32], strides = [1, 1]} : vector<8x128xf32> to vector<8x32xf32>
    %152 = arith.negf %151 : vector<8x32xf32>
    %153 = math.exp %152 : vector<8x32xf32>
    %cst_29 = arith.constant 1.000000e+00 : f32
    %154 = vector.broadcast %cst_29 : f32 to vector<8x32xf32>
    %155 = arith.addf %154, %153 : vector<8x32xf32>
    %156 = arith.divf %154, %155 : vector<8x32xf32>
    %157 = arith.mulf %148, %129 : vector<8x32xf32>
    %158 = arith.mulf %142, %150 : vector<8x32xf32>
    %159 = arith.addf %157, %158 : vector<8x32xf32>
    %160 = math.tanh %159 : vector<8x32xf32>
    %161 = arith.mulf %156, %160 : vector<8x32xf32>
    %162 = vector.extract_strided_slice %8 {offsets = [0, 5, 0], sizes = [8, 1, 128], strides = [1, 1, 1]} : vector<8x8x128xf32> to vector<8x1x128xf32>
    %163 = vector.shape_cast %162 : vector<8x1x128xf32> to vector<8x128xf32>
    %164 = arith.truncf %161 : vector<8x32xf32> to vector<8x32xbf16>
    %cst_30 = arith.constant dense<0.000000e+00> : vector<8x128xf32>
    %165 = tpu.matmul %164, %9, %cst_30 {dimension_numbers = #tpu.dot_dimension_numbers<[1], [0], [0], [1], [0, 0, 1, 1], [], []>} : vector<8x32xbf16>, vector<32x128xbf16>, vector<8x128xf32> -> vector<8x128xf32>
    %166 = arith.addf %163, %165 : vector<8x128xf32>
    %167 = vector.extract_strided_slice %166 {offsets = [0, 0], sizes = [8, 32], strides = [1, 1]} : vector<8x128xf32> to vector<8x32xf32>
    %168 = arith.negf %167 : vector<8x32xf32>
    %169 = math.exp %168 : vector<8x32xf32>
    %cst_31 = arith.constant 1.000000e+00 : f32
    %170 = vector.broadcast %cst_31 : f32 to vector<8x32xf32>
    %171 = arith.addf %170, %169 : vector<8x32xf32>
    %172 = arith.divf %170, %171 : vector<8x32xf32>
    %173 = vector.extract_strided_slice %166 {offsets = [0, 32], sizes = [8, 32], strides = [1, 1]} : vector<8x128xf32> to vector<8x32xf32>
    %174 = arith.negf %173 : vector<8x32xf32>
    %175 = math.exp %174 : vector<8x32xf32>
    %cst_32 = arith.constant 1.000000e+00 : f32
    %176 = vector.broadcast %cst_32 : f32 to vector<8x32xf32>
    %177 = arith.addf %176, %175 : vector<8x32xf32>
    %178 = arith.divf %176, %177 : vector<8x32xf32>
    %179 = vector.extract_strided_slice %166 {offsets = [0, 64], sizes = [8, 32], strides = [1, 1]} : vector<8x128xf32> to vector<8x32xf32>
    %180 = math.tanh %179 : vector<8x32xf32>
    %181 = vector.extract_strided_slice %166 {offsets = [0, 96], sizes = [8, 32], strides = [1, 1]} : vector<8x128xf32> to vector<8x32xf32>
    %182 = arith.negf %181 : vector<8x32xf32>
    %183 = math.exp %182 : vector<8x32xf32>
    %cst_33 = arith.constant 1.000000e+00 : f32
    %184 = vector.broadcast %cst_33 : f32 to vector<8x32xf32>
    %185 = arith.addf %184, %183 : vector<8x32xf32>
    %186 = arith.divf %184, %185 : vector<8x32xf32>
    %187 = arith.mulf %178, %159 : vector<8x32xf32>
    %188 = arith.mulf %172, %180 : vector<8x32xf32>
    %189 = arith.addf %187, %188 : vector<8x32xf32>
    %190 = math.tanh %189 : vector<8x32xf32>
    %191 = arith.mulf %186, %190 : vector<8x32xf32>
    %192 = vector.extract_strided_slice %8 {offsets = [0, 6, 0], sizes = [8, 1, 128], strides = [1, 1, 1]} : vector<8x8x128xf32> to vector<8x1x128xf32>
    %193 = vector.shape_cast %192 : vector<8x1x128xf32> to vector<8x128xf32>
    %194 = arith.truncf %191 : vector<8x32xf32> to vector<8x32xbf16>
    %cst_34 = arith.constant dense<0.000000e+00> : vector<8x128xf32>
    %195 = tpu.matmul %194, %9, %cst_34 {dimension_numbers = #tpu.dot_dimension_numbers<[1], [0], [0], [1], [0, 0, 1, 1], [], []>} : vector<8x32xbf16>, vector<32x128xbf16>, vector<8x128xf32> -> vector<8x128xf32>
    %196 = arith.addf %193, %195 : vector<8x128xf32>
    %197 = vector.extract_strided_slice %196 {offsets = [0, 0], sizes = [8, 32], strides = [1, 1]} : vector<8x128xf32> to vector<8x32xf32>
    %198 = arith.negf %197 : vector<8x32xf32>
    %199 = math.exp %198 : vector<8x32xf32>
    %cst_35 = arith.constant 1.000000e+00 : f32
    %200 = vector.broadcast %cst_35 : f32 to vector<8x32xf32>
    %201 = arith.addf %200, %199 : vector<8x32xf32>
    %202 = arith.divf %200, %201 : vector<8x32xf32>
    %203 = vector.extract_strided_slice %196 {offsets = [0, 32], sizes = [8, 32], strides = [1, 1]} : vector<8x128xf32> to vector<8x32xf32>
    %204 = arith.negf %203 : vector<8x32xf32>
    %205 = math.exp %204 : vector<8x32xf32>
    %cst_36 = arith.constant 1.000000e+00 : f32
    %206 = vector.broadcast %cst_36 : f32 to vector<8x32xf32>
    %207 = arith.addf %206, %205 : vector<8x32xf32>
    %208 = arith.divf %206, %207 : vector<8x32xf32>
    %209 = vector.extract_strided_slice %196 {offsets = [0, 64], sizes = [8, 32], strides = [1, 1]} : vector<8x128xf32> to vector<8x32xf32>
    %210 = math.tanh %209 : vector<8x32xf32>
    %211 = vector.extract_strided_slice %196 {offsets = [0, 96], sizes = [8, 32], strides = [1, 1]} : vector<8x128xf32> to vector<8x32xf32>
    %212 = arith.negf %211 : vector<8x32xf32>
    %213 = math.exp %212 : vector<8x32xf32>
    %cst_37 = arith.constant 1.000000e+00 : f32
    %214 = vector.broadcast %cst_37 : f32 to vector<8x32xf32>
    %215 = arith.addf %214, %213 : vector<8x32xf32>
    %216 = arith.divf %214, %215 : vector<8x32xf32>
    %217 = arith.mulf %208, %189 : vector<8x32xf32>
    %218 = arith.mulf %202, %210 : vector<8x32xf32>
    %219 = arith.addf %217, %218 : vector<8x32xf32>
    %220 = math.tanh %219 : vector<8x32xf32>
    %221 = arith.mulf %216, %220 : vector<8x32xf32>
    %222 = vector.extract_strided_slice %8 {offsets = [0, 7, 0], sizes = [8, 1, 128], strides = [1, 1, 1]} : vector<8x8x128xf32> to vector<8x1x128xf32>
    %223 = vector.shape_cast %222 : vector<8x1x128xf32> to vector<8x128xf32>
    %224 = arith.truncf %221 : vector<8x32xf32> to vector<8x32xbf16>
    %cst_38 = arith.constant dense<0.000000e+00> : vector<8x128xf32>
    %225 = tpu.matmul %224, %9, %cst_38 {dimension_numbers = #tpu.dot_dimension_numbers<[1], [0], [0], [1], [0, 0, 1, 1], [], []>} : vector<8x32xbf16>, vector<32x128xbf16>, vector<8x128xf32> -> vector<8x128xf32>
    %226 = arith.addf %223, %225 : vector<8x128xf32>
    %227 = vector.extract_strided_slice %226 {offsets = [0, 0], sizes = [8, 32], strides = [1, 1]} : vector<8x128xf32> to vector<8x32xf32>
    %228 = arith.negf %227 : vector<8x32xf32>
    %229 = math.exp %228 : vector<8x32xf32>
    %cst_39 = arith.constant 1.000000e+00 : f32
    %230 = vector.broadcast %cst_39 : f32 to vector<8x32xf32>
    %231 = arith.addf %230, %229 : vector<8x32xf32>
    %232 = arith.divf %230, %231 : vector<8x32xf32>
    %233 = vector.extract_strided_slice %226 {offsets = [0, 32], sizes = [8, 32], strides = [1, 1]} : vector<8x128xf32> to vector<8x32xf32>
    %234 = arith.negf %233 : vector<8x32xf32>
    %235 = math.exp %234 : vector<8x32xf32>
    %cst_40 = arith.constant 1.000000e+00 : f32
    %236 = vector.broadcast %cst_40 : f32 to vector<8x32xf32>
    %237 = arith.addf %236, %235 : vector<8x32xf32>
    %238 = arith.divf %236, %237 : vector<8x32xf32>
    %239 = vector.extract_strided_slice %226 {offsets = [0, 64], sizes = [8, 32], strides = [1, 1]} : vector<8x128xf32> to vector<8x32xf32>
    %240 = math.tanh %239 : vector<8x32xf32>
    %241 = vector.extract_strided_slice %226 {offsets = [0, 96], sizes = [8, 32], strides = [1, 1]} : vector<8x128xf32> to vector<8x32xf32>
    %242 = arith.negf %241 : vector<8x32xf32>
    %243 = math.exp %242 : vector<8x32xf32>
    %cst_41 = arith.constant 1.000000e+00 : f32
    %244 = vector.broadcast %cst_41 : f32 to vector<8x32xf32>
    %245 = arith.addf %244, %243 : vector<8x32xf32>
    %246 = arith.divf %244, %245 : vector<8x32xf32>
    %247 = arith.mulf %238, %219 : vector<8x32xf32>
    %248 = arith.mulf %232, %240 : vector<8x32xf32>
    %249 = arith.addf %247, %248 : vector<8x32xf32>
    %250 = math.tanh %249 : vector<8x32xf32>
    %251 = arith.mulf %246, %250 : vector<8x32xf32>
    %252 = arith.truncf %251 : vector<8x32xf32> to vector<8x32xbf16>
    %c0_42 = arith.constant 0 : index
    %c0_43 = arith.constant 0 : index
    %253 = vector.load %arg5[%c0_42, %c0_43] : memref<32x8xbf16, #tpu.memory_space<vmem>>, vector<32x8xbf16>
    %cst_44 = arith.constant dense<0.000000e+00> : vector<8x8xf32>
    %254 = tpu.matmul %252, %253, %cst_44 {dimension_numbers = #tpu.dot_dimension_numbers<[1], [0], [0], [1], [0, 0, 1, 1], [], []>} : vector<8x32xbf16>, vector<32x8xbf16>, vector<8x8xf32> -> vector<8x8xf32>
    %c0_45 = arith.constant 0 : index
    %c0_46 = arith.constant 0 : index
    %255 = vector.load %arg6[%c0_45, %c0_46] : memref<1x8xf32, #tpu.memory_space<vmem>>, vector<1x8xf32>
    %256 = vector.broadcast %255 : vector<1x8xf32> to vector<8x8xf32>
    %257 = arith.addf %254, %256 : vector<8x8xf32>
    %c0_47 = arith.constant 0 : index
    %c0_48 = arith.constant 0 : index
    %258 = vector.load %arg7[%c0_47, %c0_48] : memref<8x8xf32, #tpu.memory_space<vmem>>, vector<8x8xf32>
    tpu.vector_store %arg7[%c0_47, %c0_48], %257 {strides = array<i32>} : memref<8x8xf32, #tpu.memory_space<vmem>>, vector<8x8xf32>,
    return
  }
  func.func @transform_0(%arg0: i32) -> (i32, i32, i32) {
    %c0_i32 = arith.constant 0 : i32
    %c0_i32_0 = arith.constant 0 : i32
    %c0_i32_1 = arith.constant 0 : i32
    return %arg0, %c0_i32, %c0_i32_0 : i32, i32, i32
  }
  func.func @transform_1(%arg0: i32) -> (i32, i32) {
    %c0_i32 = arith.constant 0 : i32
    %c0_i32_0 = arith.constant 0 : i32
    %c0_i32_1 = arith.constant 0 : i32
    return %c0_i32, %c0_i32_0 : i32, i32
  }
  func.func @transform_2(%arg0: i32) -> (i32, i32) {
    %c0_i32 = arith.constant 0 : i32
    %c0_i32_0 = arith.constant 0 : i32
    %c0_i32_1 = arith.constant 0 : i32
    return %c0_i32, %c0_i32_0 : i32, i32
  }
  func.func @transform_3(%arg0: i32) -> (i32, i32) {
    %c0_i32 = arith.constant 0 : i32
    %c0_i32_0 = arith.constant 0 : i32
    %c0_i32_1 = arith.constant 0 : i32
    return %c0_i32, %c0_i32_0 : i32, i32
  }
  func.func @transform_4(%arg0: i32) -> (i32, i32) {
    %c0_i32 = arith.constant 0 : i32
    %c0_i32_0 = arith.constant 0 : i32
    %c0_i32_1 = arith.constant 0 : i32
    return %c0_i32, %c0_i32_0 : i32, i32
  }
  func.func @transform_5(%arg0: i32) -> (i32, i32) {
    %c0_i32 = arith.constant 0 : i32
    %c0_i32_0 = arith.constant 0 : i32
    %c0_i32_1 = arith.constant 0 : i32
    return %c0_i32, %c0_i32_0 : i32, i32
  }
  func.func @transform_6(%arg0: i32) -> (i32, i32) {
    %c0_i32 = arith.constant 0 : i32
    %c0_i32_0 = arith.constant 0 : i32
    return %arg0, %c0_i32 : i32, i32
  }
}

</mosaic_0001>

<llo_original>
// kernel: tpu_custom_call.1
$region0: #{tpu_custom_call.1}
  #allocation0 [shape = 'u32[]', space=smem, size = 0x4, offset = 0x4, fixed_abs, tag = 'smem constant byte address 0x4 - core index']
  #allocation1 [shape = 'u32[144,128]{1,0:T(1,128)}', space=vmem, size = 0x12000, scoped, tag = 'internal scratch']
  %s0 = inlined_call_operand.vmem [shape: bf16[8,8,4], index: 0, kind: input, shape index: {}]
  %s1 = inlined_call_operand.vmem [shape: bf16[4,128], index: 1, kind: input, shape index: {}]
  %s2 = inlined_call_operand.vmem [shape: bf16[32,128], index: 2, kind: input, shape index: {}]
  %s3 = inlined_call_operand.vmem [shape: f32[1,128], index: 3, kind: input, shape index: {}]
  %s4 = inlined_call_operand.vmem [shape: bf16[32,8], index: 4, kind: input, shape index: {}]
  %s5 = inlined_call_operand.vmem [shape: f32[1,8], index: 5, kind: input, shape index: {}]
  %s6 = inlined_call_operand.hbm [shape: f32[8,8], index: 6, kind: output, shape index: {}]
  %s7 = sld [smem:[#allocation0]]
  $region34: #{tpu_custom_call.1} parent=0
    _
  %s9 = ssub.s32 1, %s7
  %s10 = scalar_select 0, %s9, %s7
  $region1: #{tpu_custom_call.1} parent=0
    #allocation2 [shape = 'u8[4096]{0}', space=vmem, size = 0x1000, scoped, tag = 'output window, operand 0, single buffered']
    #allocation3 [shape = 's32[1]{0}', space=sflag, size = 0x4, scoped, tag = 'scoped memory for tpu_custom_call.1']
    %11 = vsyncpa [#allocation3], 0
    // Predicated region
    $region2: #{tpu_custom_call.1} parent=1 // pred_check
      _
    $region3: #{tpu_custom_call.1} parent=1 // pred_check_branch
      %13 = sbr.rel (0) target = $region5
    $region4: #{tpu_custom_call.1} parent=1 // pred_region
      _
    $region5: #{tpu_custom_call.1} parent=1 // pred_fallthru
      _
    // Predicated region
    $region6: #{tpu_custom_call.1} parent=1 // pred_check
      _
    $region7: #{tpu_custom_call.1} parent=1 // pred_check_branch
      %15 = sbr.rel (0) target = $region9
    $region8: #{tpu_custom_call.1} parent=1 // pred_region
      _
    $region9: #{tpu_custom_call.1} parent=1 // pred_fallthru
      _
    // Predicated region
    $region10: #{tpu_custom_call.1} parent=1 // pred_check
      _
    $region11: #{tpu_custom_call.1} parent=1 // pred_check_branch
      %17 = sbr.rel (0) target = $region13
    $region12: #{tpu_custom_call.1} parent=1 // pred_region
      _
    $region13: #{tpu_custom_call.1} parent=1 // pred_fallthru
      _
    // Predicated region
    $region14: #{tpu_custom_call.1} parent=1 // pred_check
      _
    $region15: #{tpu_custom_call.1} parent=1 // pred_check_branch
      %19 = sbr.rel (0) target = $region17
    $region16: #{tpu_custom_call.1} parent=1 // pred_region
      _
    $region17: #{tpu_custom_call.1} parent=1 // pred_fallthru
      _
    // Predicated region
    $region18: #{tpu_custom_call.1} parent=1 // pred_check
      _
    $region19: #{tpu_custom_call.1} parent=1 // pred_check_branch
      %21 = sbr.rel (0) target = $region21
    $region20: #{tpu_custom_call.1} parent=1 // pred_region
      _
    $region21: #{tpu_custom_call.1} parent=1 // pred_fallthru
      _
    // Predicated region
    $region22: #{tpu_custom_call.1} parent=1 // pred_check
      _
    $region23: #{tpu_custom_call.1} parent=1 // pred_check_branch
      %23 = sbr.rel (0) target = $region25
    $region24: #{tpu_custom_call.1} parent=1 // pred_region
      _
    $region25: #{tpu_custom_call.1} parent=1 // pred_fallthru
      _
    %v25 = vld [vmem:[%s0] sm:$0xf]
    %v26 = vld [vmem:[%s0 + $0x4] sm:$0xf]
    %v27 = vld [vmem:[%s0 + $0x8] sm:$0xf]
    %v28 = vld [vmem:[%s0 + $0xc] sm:$0xf]
    %v29 = vld [vmem:[%s0 + $0x10] sm:$0xf]
    %v30 = vld [vmem:[%s0 + $0x14] sm:$0xf]
    %v31 = vld [vmem:[%s0 + $0x18] sm:$0xf]
    %v32 = vld [vmem:[%s0 + $0x1c] sm:$0xf]
    %v33 = vld [vmem:[%s1] sm:$0x3]
    %v42 = vunpack.c.l.b16 %v25
    %v43 = vunpack.c.l.b16 %v26
    %v44 = vunpack.c.l.b16 %v27
    %v45 = vunpack.c.l.b16 %v28
    %v46 = vunpack.c.l.b16 %v29
    %v47 = vunpack.c.l.b16 %v30
    %v48 = vunpack.c.l.b16 %v31
    %v49 = vunpack.c.l.b16 %v32
    %v50 = vpack.c.b16 %v43, %v42
    %v51 = vpack.c.b16 %v45, %v44
    %v52 = vpack.c.b16 %v47, %v46
    %v53 = vpack.c.b16 %v49, %v48
    %vm54 = vcmask 31744
    %v56 = vsel %vm54, %v50, 0
    %v59 = vsel %vm54, %v51, 0
    %v62 = vsel %vm54, %v52, 0
    %v65 = vsel %vm54, %v53, 0
    %vm67 = vcmask 1041408
    %v69 = vsel %vm67, %v33, 0
    %71 = vmatprep.subr.bf16.mxu0 0
    %72 = vmatpush1.bf16.msra.mxu0 %v69
    %73 = vmatprep.subr.bf16.mxu0 0
    %74 = vmatpush1.bf16.msra.mxu0 0
    %75 = vmatprep.subr.bf16.mxu0 0
    %76 = vmatpush1.bf16.msra.mxu0 0
    %77 = vmatprep.subr.bf16.mxu0 0
    %78 = vmatpush1.bf16.msra.mxu0 0
    %79 = vmatprep.subr.bf16.mxu0 0
    %80 = vmatpush1.bf16.msra.mxu0 0
    %81 = vmatprep.subr.bf16.mxu0 0
    %82 = vmatpush1.bf16.msra.mxu0 0
    %83 = vmatprep.subr.bf16.mxu0 0
    %84 = vmatpush1.bf16.msra.mxu0 0
    %85 = vmatprep.subr.bf16.mxu0 0
    %86 = vmatpush1.bf16.msra.mxu0 0
    %87 = vmatprep.subr.bf16.mxu0 0
    %88 = vmatpush1.bf16.msra.mxu0 0
    %89 = vmatprep.subr.bf16.mxu0 0
    %90 = vmatpush1.bf16.msra.mxu0 0
    %91 = vmatprep.subr.bf16.mxu0 0
    %92 = vmatpush1.bf16.msra.mxu0 0
    %93 = vmatprep.subr.bf16.mxu0 0
    %94 = vmatpush1.bf16.msra.mxu0 0
    %95 = vmatprep.subr.bf16.mxu0 0
    %96 = vmatpush1.bf16.msra.mxu0 0
    %97 = vmatprep.subr.bf16.mxu0 0
    %98 = vmatpush1.bf16.msra.mxu0 0
    %99 = vmatprep.subr.bf16.mxu0 0
    %100 = vmatpush1.bf16.msra.mxu0 0
    %101 = vmatprep.subr.bf16.mxu0 0
    %102 = vmatpush1.bf16.msra.mxu0 0
    %103 = vmatprep.mubr.bf16.mxu0 0
    %104 = vmatmul.mubr.bf16.gmra.mrb[0].mxu0 %v56
    %v105 = vpop.f32.mrb[0].mxu0
    %v106 = vadd.f32 0.0, %v105
    %v107 = vpop.f32.mrb[0].mxu0
    %v108 = vpop.f32.mrb[0].mxu0
    %v109 = vadd.f32 0.0, %v108
    %v110 = vpop.f32.mrb[0].mxu0
    %111 = vmatprep.mubr.bf16.mxu0 0
    %112 = vmatmul.mubr.bf16.gmra.mrb[0].mxu0 %v59
    %v113 = vpop.f32.mrb[0].mxu0
    %v114 = vadd.f32 0.0, %v113
    %v115 = vpop.f32.mrb[0].mxu0
    %v116 = vpop.f32.mrb[0].mxu0
    %v117 = vadd.f32 0.0, %v116
    %v118 = vpop.f32.mrb[0].mxu0
    %119 = vmatprep.mubr.bf16.mxu0 0
    %120 = vmatmul.mubr.bf16.gmra.mrb[0].mxu0 %v62
    %v121 = vpop.f32.mrb[0].mxu0
    %v122 = vadd.f32 0.0, %v121
    %v123 = vpop.f32.mrb[0].mxu0
    %v124 = vpop.f32.mrb[0].mxu0
    %v125 = vadd.f32 0.0, %v124
    %v126 = vpop.f32.mrb[0].mxu0
    %127 = vmatprep.mubr.bf16.mxu0 0
    %128 = vmatmul.mubr.bf16.gmra.mrb[0].mxu0 %v65
    %v129 = vpop.f32.mrb[0].mxu0
    %v130 = vadd.f32 0.0, %v129
    %v131 = vpop.f32.mrb[0].mxu0
    %v132 = vpop.f32.mrb[0].mxu0
    %v133 = vadd.f32 0.0, %v132
    %v134 = vpop.f32.mrb[0].mxu0
    %135 = vdwg.mxu0
    %v136 = vld [vmem:[%s3] sm:$0x1]
    %v138 = vlaneseq
    %v139 = vshrl.u32 %v138, 7
    %v140 = vsub.s32 0, %v139
    %v141 = vrot.slane %v136, %v140
    %v143 = vadd.f32 %v106, %v141
    %v144 = vadd.f32 %v109, %v141
    %v145 = vadd.f32 %v114, %v141
    %v146 = vadd.f32 %v117, %v141
    %v147 = vadd.f32 %v122, %v141
    %v148 = vadd.f32 %v125, %v141
    %v149 = vadd.f32 %v130, %v141
    %v150 = vadd.f32 %v133, %v141
    %v151 = vld [vmem:[%s2] sm:$0xf]
    %v152 = vld [vmem:[%s2 + $0x4] sm:$0xf]
    %v153 = vld [vmem:[%s2 + $0x8] sm:$0xf]
    %v154 = vld [vmem:[%s2 + $0xc] sm:$0xf]
    %v159 = vunpack.c.l.b16 %v151
    %v160 = vunpack.c.l.b16 %v152
    %v161 = vunpack.c.l.b16 %v153
    %v162 = vunpack.c.l.b16 %v154
    %v163 = vpack.c.b16 %v160, %v159
    %v164 = vpack.c.b16 %v162, %v161
    %vm167 = vcmask 261120
    %v169 = vsel %vm167, 0, 0
    %171 = vmatprep.subr.bf16.mxu0 0
    %172 = vmatpush1.bf16.msra.mxu0 %v163
    %173 = vmatprep.subr.bf16.mxu0 0
    %174 = vmatpush1.bf16.msra.mxu0 %v164
    %175 = vmatprep.subr.bf16.mxu0 0
    %176 = vmatpush1.bf16.msra.mxu0 0
    %177 = vmatprep.subr.bf16.mxu0 0
    %178 = vmatpush1.bf16.msra.mxu0 0
    %179 = vmatprep.subr.bf16.mxu0 0
    %180 = vmatpush1.bf16.msra.mxu0 0
    %181 = vmatprep.subr.bf16.mxu0 0
    %182 = vmatpush1.bf16.msra.mxu0 0
    %183 = vmatprep.subr.bf16.mxu0 0
    %184 = vmatpush1.bf16.msra.mxu0 0
    %185 = vmatprep.subr.bf16.mxu0 0
    %186 = vmatpush1.bf16.msra.mxu0 0
    %187 = vmatprep.subr.bf16.mxu0 0
    %188 = vmatpush1.bf16.msra.mxu0 0
    %189 = vmatprep.subr.bf16.mxu0 0
    %190 = vmatpush1.bf16.msra.mxu0 0
    %191 = vmatprep.subr.bf16.mxu0 0
    %192 = vmatpush1.bf16.msra.mxu0 0
    %193 = vmatprep.subr.bf16.mxu0 0
    %194 = vmatpush1.bf16.msra.mxu0 0
    %195 = vmatprep.subr.bf16.mxu0 0
    %196 = vmatpush1.bf16.msra.mxu0 0
    %197 = vmatprep.subr.bf16.mxu0 0
    %198 = vmatpush1.bf16.msra.mxu0 0
    %199 = vmatprep.subr.bf16.mxu0 0
    %200 = vmatpush1.bf16.msra.mxu0 0
    %201 = vmatprep.subr.bf16.mxu0 0
    %202 = vmatpush1.bf16.msra.mxu0 0
    %203 = vmatprep.mubr.bf16.mxu0 0
    %204 = vmatmul.mubr.bf16.gmra.mrb[0].mxu0 %v169
    %v205 = vpop.f32.mrb[0].mxu0
    %v206 = vadd.f32 0.0, %v205
    %v207 = vpop.f32.mrb[0].mxu0
    %v208 = vpop.f32.mrb[0].mxu0
    %v209 = vpop.f32.mrb[0].mxu0
    %210 = vdwg.mxu0
    %v212 = vrot.slane %v206, 1
    %v213 = vrot.slane %v206, 2
    %v214 = vrot.slane %v206, 3
    %v215 = vrot.slane %v206, 4
    %v216 = vrot.slane %v206, 5
    %v217 = vrot.slane %v206, 6
    %v218 = vrot.slane %v206, 7
    %v227 = vadd.f32 %v143, %v206
    %v228 = vadd.f32 %v144, %v212
    %v229 = vadd.f32 %v145, %v213
    %v230 = vadd.f32 %v146, %v214
    %v231 = vadd.f32 %v147, %v215
    %v232 = vadd.f32 %v148, %v216
    %v233 = vadd.f32 %v149, %v217
    %v234 = vadd.f32 %v150, %v218
    %v235 = vxor.u32 %v227, 2147483648
    %v236 = vxor.u32 %v228, 2147483648
    %v237 = vxor.u32 %v229, 2147483648
    %v238 = vxor.u32 %v230, 2147483648
    %v239 = vxor.u32 %v231, 2147483648
    %v240 = vxor.u32 %v232, 2147483648
    %v241 = vxor.u32 %v233, 2147483648
    %v242 = vxor.u32 %v234, 2147483648
    %v243 = vmul.f32 %v235, 1.442695
    %v244 = vpow.pop %v243
    %v245 = vmul.f32 %v236, 1.442695
    %v246 = vpow.pop %v245
    %v247 = vmul.f32 %v237, 1.442695
    %v248 = vpow.pop %v247
    %v249 = vmul.f32 %v238, 1.442695
    %v250 = vpow.pop %v249
    %v251 = vmul.f32 %v239, 1.442695
    %v252 = vpow.pop %v251
    %v253 = vmul.f32 %v240, 1.442695
    %v254 = vpow.pop %v253
    %v255 = vmul.f32 %v241, 1.442695
    %v256 = vpow.pop %v255
    %v257 = vmul.f32 %v242, 1.442695
    %v258 = vpow.pop %v257
    %v259 = vadd.f32 %v244, 1.0
    %v260 = vadd.f32 %v246, 1.0
    %v261 = vadd.f32 %v248, 1.0
    %v262 = vadd.f32 %v250, 1.0
    %v263 = vadd.f32 %v252, 1.0
    %v264 = vadd.f32 %v254, 1.0
    %v265 = vadd.f32 %v256, 1.0
    %v266 = vadd.f32 %v258, 1.0
    %v267 = vrcp.pop %v259
    %v268 = vmul.f32 1.0, %v267
    %v269 = vrcp.pop %v260
    %v270 = vmul.f32 1.0, %v269
    %v271 = vrcp.pop %v261
    %v272 = vmul.f32 1.0, %v271
    %v273 = vrcp.pop %v262
    %v274 = vmul.f32 1.0, %v273
    %v275 = vrcp.pop %v263
    %v276 = vmul.f32 1.0, %v275
    %v277 = vrcp.pop %v264
    %v278 = vmul.f32 1.0, %v277
    %v279 = vrcp.pop %v265
    %v280 = vmul.f32 1.0, %v279
    %v281 = vrcp.pop %v266
    %v282 = vmul.f32 1.0, %v281
    %v283 = vtanh.pop %v227
    %v284 = vtanh.pop %v228
    %v285 = vtanh.pop %v229
    %v286 = vtanh.pop %v230
    %v287 = vtanh.pop %v231
    %v288 = vtanh.pop %v232
    %v289 = vtanh.pop %v233
    %v290 = vtanh.pop %v234
    %v291 = vmul.f32 %v268, 0.0
    %v292 = vmul.f32 %v270, 0.0
    %v293 = vmul.f32 %v272, 0.0
    %v294 = vmul.f32 %v274, 0.0
    %v295 = vmul.f32 %v276, 0.0
    %v296 = vmul.f32 %v278, 0.0
    %v297 = vmul.f32 %v280, 0.0
    %v298 = vmul.f32 %v282, 0.0
    %307 = vrot.lane.b32.xlu0 %v283, 64
    %v308 = vpop.permute.xlu0 %307
    %309 = vrot.lane.b32.xlu0 %v284, 64
    %v310 = vpop.permute.xlu0 %309
    %311 = vrot.lane.b32.xlu0 %v285, 64
    %v312 = vpop.permute.xlu0 %311
    %313 = vrot.lane.b32.xlu0 %v286, 64
    %v314 = vpop.permute.xlu0 %313
    %315 = vrot.lane.b32.xlu0 %v287, 64
    %v316 = vpop.permute.xlu0 %315
    %317 = vrot.lane.b32.xlu0 %v288, 64
    %v318 = vpop.permute.xlu0 %317
    %319 = vrot.lane.b32.xlu0 %v289, 64
    %v320 = vpop.permute.xlu0 %319
    %321 = vrot.lane.b32.xlu0 %v290, 64
    %v322 = vpop.permute.xlu0 %321
    %v331 = vmul.f32 %v268, %v308
    %v332 = vmul.f32 %v270, %v310
    %v333 = vmul.f32 %v272, %v312
    %v334 = vmul.f32 %v274, %v314
    %v335 = vmul.f32 %v276, %v316
    %v336 = vmul.f32 %v278, %v318
    %v337 = vmul.f32 %v280, %v320
    %v338 = vmul.f32 %v282, %v322
    %347 = vrot.lane.b32.xlu0 %v331, 32
    %v348 = vpop.permute.xlu0 %347
    %349 = vrot.lane.b32.xlu0 %v332, 32
    %v350 = vpop.permute.xlu0 %349
    %351 = vrot.lane.b32.xlu0 %v333, 32
    %v352 = vpop.permute.xlu0 %351
    %353 = vrot.lane.b32.xlu0 %v334, 32
    %v354 = vpop.permute.xlu0 %353
    %355 = vrot.lane.b32.xlu0 %v335, 32
    %v356 = vpop.permute.xlu0 %355
    %357 = vrot.lane.b32.xlu0 %v336, 32
    %v358 = vpop.permute.xlu0 %357
    %359 = vrot.lane.b32.xlu0 %v337, 32
    %v360 = vpop.permute.xlu0 %359
    %361 = vrot.lane.b32.xlu0 %v338, 32
    %v362 = vpop.permute.xlu0 %361
    %v371 = vadd.f32 %v291, %v348
    %v372 = vadd.f32 %v292, %v350
    %v373 = vadd.f32 %v293, %v352
    %v374 = vadd.f32 %v294, %v354
    %v375 = vadd.f32 %v295, %v356
    %v376 = vadd.f32 %v296, %v358
    %v377 = vadd.f32 %v297, %v360
    %v378 = vadd.f32 %v298, %v362
    %v379 = vtanh.pop %v371
    %v380 = vtanh.pop %v372
    %v381 = vtanh.pop %v373
    %v382 = vtanh.pop %v374
    %v383 = vtanh.pop %v375
    %v384 = vtanh.pop %v376
    %v385 = vtanh.pop %v377
    %v386 = vtanh.pop %v378
    %395 = vrot.lane.b32.xlu0 %v379, 64
    %v396 = vpop.permute.xlu0 %395
    %397 = vrot.lane.b32.xlu0 %v380, 64
    %v398 = vpop.permute.xlu0 %397
    %399 = vrot.lane.b32.xlu0 %v381, 64
    %v400 = vpop.permute.xlu0 %399
    %401 = vrot.lane.b32.xlu0 %v382, 64
    %v402 = vpop.permute.xlu0 %401
    %403 = vrot.lane.b32.xlu0 %v383, 64
    %v404 = vpop.permute.xlu0 %403
    %405 = vrot.lane.b32.xlu0 %v384, 64
    %v406 = vpop.permute.xlu0 %405
    %407 = vrot.lane.b32.xlu0 %v385, 64
    %v408 = vpop.permute.xlu0 %407
    %409 = vrot.lane.b32.xlu0 %v386, 64
    %v410 = vpop.permute.xlu0 %409
    %v419 = vmul.f32 %v268, %v396
    %v420 = vmul.f32 %v270, %v398
    %v421 = vmul.f32 %v272, %v400
    %v422 = vmul.f32 %v274, %v402
    %v423 = vmul.f32 %v276, %v404
    %v424 = vmul.f32 %v278, %v406
    %v425 = vmul.f32 %v280, %v408
    %v426 = vmul.f32 %v282, %v410
    %v427 = vpack.c.bf16 %v419, %v419
    %v428 = vpack.c.bf16 %v420, %v420
    %v429 = vpack.c.bf16 %v421, %v421
    %v430 = vpack.c.bf16 %v422, %v422
    %v431 = vpack.c.bf16 %v423, %v423
    %v432 = vpack.c.bf16 %v424, %v424
    %v433 = vpack.c.bf16 %v425, %v425
    %v434 = vpack.c.bf16 %v426, %v426
    %v443 = vunpack.c.l.b16 %v427
    %v444 = vunpack.c.l.b16 %v428
    %v445 = vunpack.c.l.b16 %v429
    %v446 = vunpack.c.l.b16 %v430
    %v447 = vunpack.c.l.b16 %v431
    %v448 = vunpack.c.l.b16 %v432
    %v449 = vunpack.c.l.b16 %v433
    %v450 = vunpack.c.l.b16 %v434
    %v451 = vrot.slane %v444, 7
    %vm452 = vcmask 1041409
    %v453 = vsel %vm452, %v451, %v443
    %v454 = vrot.slane %v445, 6
    %vm455 = vcmask 1042434
    %v456 = vsel %vm455, %v454, %v453
    %v457 = vrot.slane %v446, 5
    %vm458 = vcmask 1043459
    %v459 = vsel %vm458, %v457, %v456
    %v460 = vrot.slane %v447, 4
    %vm461 = vcmask 1044484
    %v462 = vsel %vm461, %v460, %v459
    %v463 = vrot.slane %v448, 3
    %vm464 = vcmask 1045509
    %v465 = vsel %vm464, %v463, %v462
    %v466 = vrot.slane %v449, 2
    %vm467 = vcmask 1046534
    %v468 = vsel %vm467, %v466, %v465
    %v469 = vrot.slane %v450, 1
    %vm470 = vcmask 1047559
    %v471 = vsel %vm470, %v469, %v468
    %v472 = vpack.c.b16 %v471, %v471
    %473 = vrot.lane.b32.xlu0 %v472, 32
    %v474 = vpop.permute.xlu0 %473
    %v476 = vsel %vm167, %v474, 0
    %478 = vmatprep.subr.bf16.mxu0 0
    %479 = vmatpush1.bf16.msra.mxu0 %v163
    %480 = vmatprep.subr.bf16.mxu0 0
    %481 = vmatpush1.bf16.msra.mxu0 %v164
    %482 = vmatprep.subr.bf16.mxu0 0
    %483 = vmatpush1.bf16.msra.mxu0 0
    %484 = vmatprep.subr.bf16.mxu0 0
    %485 = vmatpush1.bf16.msra.mxu0 0
    %486 = vmatprep.subr.bf16.mxu0 0
    %487 = vmatpush1.bf16.msra.mxu0 0
    %488 = vmatprep.subr.bf16.mxu0 0
    %489 = vmatpush1.bf16.msra.mxu0 0
    %490 = vmatprep.subr.bf16.mxu0 0
    %491 = vmatpush1.bf16.msra.mxu0 0
    %492 = vmatprep.subr.bf16.mxu0 0
    %493 = vmatpush1.bf16.msra.mxu0 0
    %494 = vmatprep.subr.bf16.mxu0 0
    %495 = vmatpush1.bf16.msra.mxu0 0
    %496 = vmatprep.subr.bf16.mxu0 0
    %497 = vmatpush1.bf16.msra.mxu0 0
    %498 = vmatprep.subr.bf16.mxu0 0
    %499 = vmatpush1.bf16.msra.mxu0 0
    %500 = vmatprep.subr.bf16.mxu0 0
    %501 = vmatpush1.bf16.msra.mxu0 0
    %502 = vmatprep.subr.bf16.mxu0 0
    %503 = vmatpush1.bf16.msra.mxu0 0
    %504 = vmatprep.subr.bf16.mxu0 0
    %505 = vmatpush1.bf16.msra.mxu0 0
    %506 = vmatprep.subr.bf16.mxu0 0
    %507 = vmatpush1.bf16.msra.mxu0 0
    %508 = vmatprep.subr.bf16.mxu0 0
    %509 = vmatpush1.bf16.msra.mxu0 0
    %510 = vmatprep.mubr.bf16.mxu0 0
    %511 = vmatmul.mubr.bf16.gmra.mrb[0].mxu0 %v476
    %v512 = vpop.f32.mrb[0].mxu0
    %v513 = vadd.f32 0.0, %v512
    %v514 = vpop.f32.mrb[0].mxu0
    %v515 = vpop.f32.mrb[0].mxu0
    %v516 = vpop.f32.mrb[0].mxu0
    %517 = vdwg.mxu0
    %v519 = vrot.slane %v513, 7
    %v520 = vrot.slane %v513, 1
    %v521 = vrot.slane %v513, 2
    %v522 = vrot.slane %v513, 3
    %v523 = vrot.slane %v513, 4
    %v524 = vrot.slane %v513, 5
    %v525 = vrot.slane %v513, 6
    %v534 = vadd.f32 %v143, %v519
    %v535 = vadd.f32 %v144, %v513
    %v536 = vadd.f32 %v145, %v520
    %v537 = vadd.f32 %v146, %v521
    %v538 = vadd.f32 %v147, %v522
    %v539 = vadd.f32 %v148, %v523
    %v540 = vadd.f32 %v149, %v524
    %v541 = vadd.f32 %v150, %v525
    %v542 = vxor.u32 %v534, 2147483648
    %v543 = vxor.u32 %v535, 2147483648
    %v544 = vxor.u32 %v536, 2147483648
    %v545 = vxor.u32 %v537, 2147483648
    %v546 = vxor.u32 %v538, 2147483648
    %v547 = vxor.u32 %v539, 2147483648
    %v548 = vxor.u32 %v540, 2147483648
    %v549 = vxor.u32 %v541, 2147483648
    %v550 = vmul.f32 %v542, 1.442695
    %v551 = vpow.pop %v550
    %v552 = vmul.f32 %v543, 1.442695
    %v553 = vpow.pop %v552
    %v554 = vmul.f32 %v544, 1.442695
    %v555 = vpow.pop %v554
    %v556 = vmul.f32 %v545, 1.442695
    %v557 = vpow.pop %v556
    %v558 = vmul.f32 %v546, 1.442695
    %v559 = vpow.pop %v558
    %v560 = vmul.f32 %v547, 1.442695
    %v561 = vpow.pop %v560
    %v562 = vmul.f32 %v548, 1.442695
    %v563 = vpow.pop %v562
    %v564 = vmul.f32 %v549, 1.442695
    %v565 = vpow.pop %v564
    %v566 = vadd.f32 %v551, 1.0
    %v567 = vadd.f32 %v553, 1.0
    %v568 = vadd.f32 %v555, 1.0
    %v569 = vadd.f32 %v557, 1.0
    %v570 = vadd.f32 %v559, 1.0
    %v571 = vadd.f32 %v561, 1.0
    %v572 = vadd.f32 %v563, 1.0
    %v573 = vadd.f32 %v565, 1.0
    %v574 = vrcp.pop %v566
    %v575 = vmul.f32 1.0, %v574
    %v576 = vrcp.pop %v567
    %v577 = vmul.f32 1.0, %v576
    %v578 = vrcp.pop %v568
    %v579 = vmul.f32 1.0, %v578
    %v580 = vrcp.pop %v569
    %v581 = vmul.f32 1.0, %v580
    %v582 = vrcp.pop %v570
    %v583 = vmul.f32 1.0, %v582
    %v584 = vrcp.pop %v571
    %v585 = vmul.f32 1.0, %v584
    %v586 = vrcp.pop %v572
    %v587 = vmul.f32 1.0, %v586
    %v588 = vrcp.pop %v573
    %v589 = vmul.f32 1.0, %v588
    %v590 = vtanh.pop %v534
    %v591 = vtanh.pop %v535
    %v592 = vtanh.pop %v536
    %v593 = vtanh.pop %v537
    %v594 = vtanh.pop %v538
    %v595 = vtanh.pop %v539
    %v596 = vtanh.pop %v540
    %v597 = vtanh.pop %v541
    %v606 = vrot.slane %v371, 7
    %v607 = vrot.slane %v372, 7
    %v608 = vrot.slane %v373, 7
    %v609 = vrot.slane %v374, 7
    %v610 = vrot.slane %v375, 7
    %v611 = vrot.slane %v376, 7
    %v612 = vrot.slane %v377, 7
    %v613 = vrot.slane %v378, 7
    %v622 = vmul.f32 %v575, %v606
    %v623 = vmul.f32 %v577, %v607
    %v624 = vmul.f32 %v579, %v608
    %v625 = vmul.f32 %v581, %v609
    %v626 = vmul.f32 %v583, %v610
    %v627 = vmul.f32 %v585, %v611
    %v628 = vmul.f32 %v587, %v612
    %v629 = vmul.f32 %v589, %v613
    %638 = vrot.lane.b32.xlu0 %v590, 64
    %v639 = vpop.permute.xlu0 %638
    %640 = vrot.lane.b32.xlu0 %v591, 64
    %v641 = vpop.permute.xlu0 %640
    %642 = vrot.lane.b32.xlu0 %v592, 64
    %v643 = vpop.permute.xlu0 %642
    %644 = vrot.lane.b32.xlu0 %v593, 64
    %v645 = vpop.permute.xlu0 %644
    %646 = vrot.lane.b32.xlu0 %v594, 64
    %v647 = vpop.permute.xlu0 %646
    %648 = vrot.lane.b32.xlu0 %v595, 64
    %v649 = vpop.permute.xlu0 %648
    %650 = vrot.lane.b32.xlu0 %v596, 64
    %v651 = vpop.permute.xlu0 %650
    %652 = vrot.lane.b32.xlu0 %v597, 64
    %v653 = vpop.permute.xlu0 %652
    %v662 = vmul.f32 %v575, %v639
    %v663 = vmul.f32 %v577, %v641
    %v664 = vmul.f32 %v579, %v643
    %v665 = vmul.f32 %v581, %v645
    %v666 = vmul.f32 %v583, %v647
    %v667 = vmul.f32 %v585, %v649
    %v668 = vmul.f32 %v587, %v651
    %v669 = vmul.f32 %v589, %v653
    %678 = vrot.lane.b32.xlu0 %v662, 32
    %v679 = vpop.permute.xlu0 %678
    %680 = vrot.lane.b32.xlu0 %v663, 32
    %v681 = vpop.permute.xlu0 %680
    %682 = vrot.lane.b32.xlu0 %v664, 32
    %v683 = vpop.permute.xlu0 %682
    %684 = vrot.lane.b32.xlu0 %v665, 32
    %v685 = vpop.permute.xlu0 %684
    %686 = vrot.lane.b32.xlu0 %v666, 32
    %v687 = vpop.permute.xlu0 %686
    %688 = vrot.lane.b32.xlu0 %v667, 32
    %v689 = vpop.permute.xlu0 %688
    %690 = vrot.lane.b32.xlu0 %v668, 32
    %v691 = vpop.permute.xlu0 %690
    %692 = vrot.lane.b32.xlu0 %v669, 32
    %v693 = vpop.permute.xlu0 %692
    %v702 = vadd.f32 %v622, %v679
    %v703 = vadd.f32 %v623, %v681
    %v704 = vadd.f32 %v624, %v683
    %v705 = vadd.f32 %v625, %v685
    %v706 = vadd.f32 %v626, %v687
    %v707 = vadd.f32 %v627, %v689
    %v708 = vadd.f32 %v628, %v691
    %v709 = vadd.f32 %v629, %v693
    %v710 = vtanh.pop %v702
    %v711 = vtanh.pop %v703
    %v712 = vtanh.pop %v704
    %v713 = vtanh.pop %v705
    %v714 = vtanh.pop %v706
    %v715 = vtanh.pop %v707
    %v716 = vtanh.pop %v708
    %v717 = vtanh.pop %v709
    %726 = vrot.lane.b32.xlu0 %v710, 64
    %v727 = vpop.permute.xlu0 %726
    %728 = vrot.lane.b32.xlu0 %v711, 64
    %v729 = vpop.permute.xlu0 %728
    %730 = vrot.lane.b32.xlu0 %v712, 64
    %v731 = vpop.permute.xlu0 %730
    %732 = vrot.lane.b32.xlu0 %v713, 64
    %v733 = vpop.permute.xlu0 %732
    %734 = vrot.lane.b32.xlu0 %v714, 64
    %v735 = vpop.permute.xlu0 %734
    %736 = vrot.lane.b32.xlu0 %v715, 64
    %v737 = vpop.permute.xlu0 %736
    %738 = vrot.lane.b32.xlu0 %v716, 64
    %v739 = vpop.permute.xlu0 %738
    %740 = vrot.lane.b32.xlu0 %v717, 64
    %v741 = vpop.permute.xlu0 %740
    %v750 = vmul.f32 %v575, %v727
    %v751 = vmul.f32 %v577, %v729
    %v752 = vmul.f32 %v579, %v731
    %v753 = vmul.f32 %v581, %v733
    %v754 = vmul.f32 %v583, %v735
    %v755 = vmul.f32 %v585, %v737
    %v756 = vmul.f32 %v587, %v739
    %v757 = vmul.f32 %v589, %v741
    %v758 = vpack.c.bf16 %v750, %v750
    %v759 = vpack.c.bf16 %v751, %v751
    %v760 = vpack.c.bf16 %v752, %v752
    %v761 = vpack.c.bf16 %v753, %v753
    %v762 = vpack.c.bf16 %v754, %v754
    %v763 = vpack.c.bf16 %v755, %v755
    %v764 = vpack.c.bf16 %v756, %v756
    %v765 = vpack.c.bf16 %v757, %v757
    %v774 = vunpack.c.l.b16 %v758
    %v775 = vunpack.c.l.b16 %v759
    %v776 = vunpack.c.l.b16 %v760
    %v777 = vunpack.c.l.b16 %v761
    %v778 = vunpack.c.l.b16 %v762
    %v779 = vunpack.c.l.b16 %v763
    %v780 = vunpack.c.l.b16 %v764
    %v781 = vunpack.c.l.b16 %v765
    %v782 = vrot.slane %v774, 1
    %v783 = vsel %vm452, %v775, %v782
    %v784 = vrot.slane %v776, 7
    %v785 = vsel %vm455, %v784, %v783
    %v786 = vrot.slane %v777, 6
    %v787 = vsel %vm458, %v786, %v785
    %v788 = vrot.slane %v778, 5
    %v789 = vsel %vm461, %v788, %v787
    %v790 = vrot.slane %v779, 4
    %v791 = vsel %vm464, %v790, %v789
    %v792 = vrot.slane %v780, 3
    %v793 = vsel %vm467, %v792, %v791
    %v794 = vrot.slane %v781, 2
    %v795 = vsel %vm470, %v794, %v793
    %v796 = vpack.c.b16 %v795, %v795
    %797 = vrot.lane.b32.xlu0 %v796, 32
    %v798 = vpop.permute.xlu0 %797
    %v800 = vsel %vm167, %v798, 0
    %802 = vmatprep.subr.bf16.mxu0 0
    %803 = vmatpush1.bf16.msra.mxu0 %v163
    %804 = vmatprep.subr.bf16.mxu0 0
    %805 = vmatpush1.bf16.msra.mxu0 %v164
    %806 = vmatprep.subr.bf16.mxu0 0
    %807 = vmatpush1.bf16.msra.mxu0 0
    %808 = vmatprep.subr.bf16.mxu0 0
    %809 = vmatpush1.bf16.msra.mxu0 0
    %810 = vmatprep.subr.bf16.mxu0 0
    %811 = vmatpush1.bf16.msra.mxu0 0
    %812 = vmatprep.subr.bf16.mxu0 0
    %813 = vmatpush1.bf16.msra.mxu0 0
    %814 = vmatprep.subr.bf16.mxu0 0
    %815 = vmatpush1.bf16.msra.mxu0 0
    %816 = vmatprep.subr.bf16.mxu0 0
    %817 = vmatpush1.bf16.msra.mxu0 0
    %818 = vmatprep.subr.bf16.mxu0 0
    %819 = vmatpush1.bf16.msra.mxu0 0
    %820 = vmatprep.subr.bf16.mxu0 0
    %821 = vmatpush1.bf16.msra.mxu0 0
    %822 = vmatprep.subr.bf16.mxu0 0
    %823 = vmatpush1.bf16.msra.mxu0 0
    %824 = vmatprep.subr.bf16.mxu0 0
    %825 = vmatpush1.bf16.msra.mxu0 0
    %826 = vmatprep.subr.bf16.mxu0 0
    %827 = vmatpush1.bf16.msra.mxu0 0
    %828 = vmatprep.subr.bf16.mxu0 0
    %829 = vmatpush1.bf16.msra.mxu0 0
    %830 = vmatprep.subr.bf16.mxu0 0
    %831 = vmatpush1.bf16.msra.mxu0 0
    %832 = vmatprep.subr.bf16.mxu0 0
    %833 = vmatpush1.bf16.msra.mxu0 0
    %834 = vmatprep.mubr.bf16.mxu0 0
    %835 = vmatmul.mubr.bf16.gmra.mrb[0].mxu0 %v800
    %v836 = vpop.f32.mrb[0].mxu0
    %v837 = vadd.f32 0.0, %v836
    %v838 = vpop.f32.mrb[0].mxu0
    %v839 = vpop.f32.mrb[0].mxu0
    %v840 = vpop.f32.mrb[0].mxu0
    %841 = vdwg.mxu0
    %v843 = vrot.slane %v837, 6
    %v844 = vrot.slane %v837, 7
    %v845 = vrot.slane %v837, 1
    %v846 = vrot.slane %v837, 2
    %v847 = vrot.slane %v837, 3
    %v848 = vrot.slane %v837, 4
    %v849 = vrot.slane %v837, 5
    %v858 = vadd.f32 %v143, %v843
    %v859 = vadd.f32 %v144, %v844
    %v860 = vadd.f32 %v145, %v837
    %v861 = vadd.f32 %v146, %v845
    %v862 = vadd.f32 %v147, %v846
    %v863 = vadd.f32 %v148, %v847
    %v864 = vadd.f32 %v149, %v848
    %v865 = vadd.f32 %v150, %v849
    %v866 = vxor.u32 %v858, 2147483648
    %v867 = vxor.u32 %v859, 2147483648
    %v868 = vxor.u32 %v860, 2147483648
    %v869 = vxor.u32 %v861, 2147483648
    %v870 = vxor.u32 %v862, 2147483648
    %v871 = vxor.u32 %v863, 2147483648
    %v872 = vxor.u32 %v864, 2147483648
    %v873 = vxor.u32 %v865, 2147483648
    %v874 = vmul.f32 %v866, 1.442695
    %v875 = vpow.pop %v874
    %v876 = vmul.f32 %v867, 1.442695
    %v877 = vpow.pop %v876
    %v878 = vmul.f32 %v868, 1.442695
    %v879 = vpow.pop %v878
    %v880 = vmul.f32 %v869, 1.442695
    %v881 = vpow.pop %v880
    %v882 = vmul.f32 %v870, 1.442695
    %v883 = vpow.pop %v882
    %v884 = vmul.f32 %v871, 1.442695
    %v885 = vpow.pop %v884
    %v886 = vmul.f32 %v872, 1.442695
    %v887 = vpow.pop %v886
    %v888 = vmul.f32 %v873, 1.442695
    %v889 = vpow.pop %v888
    %v890 = vadd.f32 %v875, 1.0
    %v891 = vadd.f32 %v877, 1.0
    %v892 = vadd.f32 %v879, 1.0
    %v893 = vadd.f32 %v881, 1.0
    %v894 = vadd.f32 %v883, 1.0
    %v895 = vadd.f32 %v885, 1.0
    %v896 = vadd.f32 %v887, 1.0
    %v897 = vadd.f32 %v889, 1.0
    %v898 = vrcp.pop %v890
    %v899 = vmul.f32 1.0, %v898
    %v900 = vrcp.pop %v891
    %v901 = vmul.f32 1.0, %v900
    %v902 = vrcp.pop %v892
    %v903 = vmul.f32 1.0, %v902
    %v904 = vrcp.pop %v893
    %v905 = vmul.f32 1.0, %v904
    %v906 = vrcp.pop %v894
    %v907 = vmul.f32 1.0, %v906
    %v908 = vrcp.pop %v895
    %v909 = vmul.f32 1.0, %v908
    %v910 = vrcp.pop %v896
    %v911 = vmul.f32 1.0, %v910
    %v912 = vrcp.pop %v897
    %v913 = vmul.f32 1.0, %v912
    %v914 = vtanh.pop %v858
    %v915 = vtanh.pop %v859
    %v916 = vtanh.pop %v860
    %v917 = vtanh.pop %v861
    %v918 = vtanh.pop %v862
    %v919 = vtanh.pop %v863
    %v920 = vtanh.pop %v864
    %v921 = vtanh.pop %v865
    %v930 = vrot.slane %v702, 7
    %v931 = vrot.slane %v703, 7
    %v932 = vrot.slane %v704, 7
    %v933 = vrot.slane %v705, 7
    %v934 = vrot.slane %v706, 7
    %v935 = vrot.slane %v707, 7
    %v936 = vrot.slane %v708, 7
    %v937 = vrot.slane %v709, 7
    %v946 = vmul.f32 %v899, %v930
    %v947 = vmul.f32 %v901, %v931
    %v948 = vmul.f32 %v903, %v932
    %v949 = vmul.f32 %v905, %v933
    %v950 = vmul.f32 %v907, %v934
    %v951 = vmul.f32 %v909, %v935
    %v952 = vmul.f32 %v911, %v936
    %v953 = vmul.f32 %v913, %v937
    %962 = vrot.lane.b32.xlu0 %v914, 64
    %v963 = vpop.permute.xlu0 %962
    %964 = vrot.lane.b32.xlu0 %v915, 64
    %v965 = vpop.permute.xlu0 %964
    %966 = vrot.lane.b32.xlu0 %v916, 64
    %v967 = vpop.permute.xlu0 %966
    %968 = vrot.lane.b32.xlu0 %v917, 64
    %v969 = vpop.permute.xlu0 %968
    %970 = vrot.lane.b32.xlu0 %v918, 64
    %v971 = vpop.permute.xlu0 %970
    %972 = vrot.lane.b32.xlu0 %v919, 64
    %v973 = vpop.permute.xlu0 %972
    %974 = vrot.lane.b32.xlu0 %v920, 64
    %v975 = vpop.permute.xlu0 %974
    %976 = vrot.lane.b32.xlu0 %v921, 64
    %v977 = vpop.permute.xlu0 %976
    %v986 = vmul.f32 %v899, %v963
    %v987 = vmul.f32 %v901, %v965
    %v988 = vmul.f32 %v903, %v967
    %v989 = vmul.f32 %v905, %v969
    %v990 = vmul.f32 %v907, %v971
    %v991 = vmul.f32 %v909, %v973
    %v992 = vmul.f32 %v911, %v975
    %v993 = vmul.f32 %v913, %v977
    %1002 = vrot.lane.b32.xlu0 %v986, 32
    %v1003 = vpop.permute.xlu0 %1002
    %1004 = vrot.lane.b32.xlu0 %v987, 32
    %v1005 = vpop.permute.xlu0 %1004
    %1006 = vrot.lane.b32.xlu0 %v988, 32
    %v1007 = vpop.permute.xlu0 %1006
    %1008 = vrot.lane.b32.xlu0 %v989, 32
    %v1009 = vpop.permute.xlu0 %1008
    %1010 = vrot.lane.b32.xlu0 %v990, 32
    %v1011 = vpop.permute.xlu0 %1010
    %1012 = vrot.lane.b32.xlu0 %v991, 32
    %v1013 = vpop.permute.xlu0 %1012
    %1014 = vrot.lane.b32.xlu0 %v992, 32
    %v1015 = vpop.permute.xlu0 %1014
    %1016 = vrot.lane.b32.xlu0 %v993, 32
    %v1017 = vpop.permute.xlu0 %1016
    %v1026 = vadd.f32 %v946, %v1003
    %v1027 = vadd.f32 %v947, %v1005
    %v1028 = vadd.f32 %v948, %v1007
    %v1029 = vadd.f32 %v949, %v1009
    %v1030 = vadd.f32 %v950, %v1011
    %v1031 = vadd.f32 %v951, %v1013
    %v1032 = vadd.f32 %v952, %v1015
    %v1033 = vadd.f32 %v953, %v1017
    %v1034 = vtanh.pop %v1026
    %v1035 = vtanh.pop %v1027
    %v1036 = vtanh.pop %v1028
    %v1037 = vtanh.pop %v1029
    %v1038 = vtanh.pop %v1030
    %v1039 = vtanh.pop %v1031
    %v1040 = vtanh.pop %v1032
    %v1041 = vtanh.pop %v1033
    %1050 = vrot.lane.b32.xlu0 %v1034, 64
    %v1051 = vpop.permute.xlu0 %1050
    %1052 = vrot.lane.b32.xlu0 %v1035, 64
    %v1053 = vpop.permute.xlu0 %1052
    %1054 = vrot.lane.b32.xlu0 %v1036, 64
    %v1055 = vpop.permute.xlu0 %1054
    %1056 = vrot.lane.b32.xlu0 %v1037, 64
    %v1057 = vpop.permute.xlu0 %1056
    %1058 = vrot.lane.b32.xlu0 %v1038, 64
    %v1059 = vpop.permute.xlu0 %1058
    %1060 = vrot.lane.b32.xlu0 %v1039, 64
    %v1061 = vpop.permute.xlu0 %1060
    %1062 = vrot.lane.b32.xlu0 %v1040, 64
    %v1063 = vpop.permute.xlu0 %1062
    %1064 = vrot.lane.b32.xlu0 %v1041, 64
    %v1065 = vpop.permute.xlu0 %1064
    %v1074 = vmul.f32 %v899, %v1051
    %v1075 = vmul.f32 %v901, %v1053
    %v1076 = vmul.f32 %v903, %v1055
    %v1077 = vmul.f32 %v905, %v1057
    %v1078 = vmul.f32 %v907, %v1059
    %v1079 = vmul.f32 %v909, %v1061
    %v1080 = vmul.f32 %v911, %v1063
    %v1081 = vmul.f32 %v913, %v1065
    %v1082 = vpack.c.bf16 %v1074, %v1074
    %v1083 = vpack.c.bf16 %v1075, %v1075
    %v1084 = vpack.c.bf16 %v1076, %v1076
    %v1085 = vpack.c.bf16 %v1077, %v1077
    %v1086 = vpack.c.bf16 %v1078, %v1078
    %v1087 = vpack.c.bf16 %v1079, %v1079
    %v1088 = vpack.c.bf16 %v1080, %v1080
    %v1089 = vpack.c.bf16 %v1081, %v1081
    %v1098 = vunpack.c.l.b16 %v1082
    %v1099 = vunpack.c.l.b16 %v1083
    %v1100 = vunpack.c.l.b16 %v1084
    %v1101 = vunpack.c.l.b16 %v1085
    %v1102 = vunpack.c.l.b16 %v1086
    %v1103 = vunpack.c.l.b16 %v1087
    %v1104 = vunpack.c.l.b16 %v1088
    %v1105 = vunpack.c.l.b16 %v1089
    %v1106 = vrot.slane %v1098, 2
    %v1107 = vrot.slane %v1099, 1
    %v1108 = vsel %vm452, %v1107, %v1106
    %v1109 = vsel %vm455, %v1100, %v1108
    %v1110 = vrot.slane %v1101, 7
    %v1111 = vsel %vm458, %v1110, %v1109
    %v1112 = vrot.slane %v1102, 6
    %v1113 = vsel %vm461, %v1112, %v1111
    %v1114 = vrot.slane %v1103, 5
    %v1115 = vsel %vm464, %v1114, %v1113
    %v1116 = vrot.slane %v1104, 4
    %v1117 = vsel %vm467, %v1116, %v1115
    %v1118 = vrot.slane %v1105, 3
    %v1119 = vsel %vm470, %v1118, %v1117
    %v1120 = vpack.c.b16 %v1119, %v1119
    %1121 = vrot.lane.b32.xlu0 %v1120, 32
    %v1122 = vpop.permute.xlu0 %1121
    %v1124 = vsel %vm167, %v1122, 0
    %1126 = vmatprep.subr.bf16.mxu0 0
    %1127 = vmatpush1.bf16.msra.mxu0 %v163
    %1128 = vmatprep.subr.bf16.mxu0 0
    %1129 = vmatpush1.bf16.msra.mxu0 %v164
    %1130 = vmatprep.subr.bf16.mxu0 0
    %1131 = vmatpush1.bf16.msra.mxu0 0
    %1132 = vmatprep.subr.bf16.mxu0 0
    %1133 = vmatpush1.bf16.msra.mxu0 0
    %1134 = vmatprep.subr.bf16.mxu0 0
    %1135 = vmatpush1.bf16.msra.mxu0 0
    %1136 = vmatprep.subr.bf16.mxu0 0
    %1137 = vmatpush1.bf16.msra.mxu0 0
    %1138 = vmatprep.subr.bf16.mxu0 0
    %1139 = vmatpush1.bf16.msra.mxu0 0
    %1140 = vmatprep.subr.bf16.mxu0 0
    %1141 = vmatpush1.bf16.msra.mxu0 0
    %1142 = vmatprep.subr.bf16.mxu0 0
    %1143 = vmatpush1.bf16.msra.mxu0 0
    %1144 = vmatprep.subr.bf16.mxu0 0
    %1145 = vmatpush1.bf16.msra.mxu0 0
    %1146 = vmatprep.subr.bf16.mxu0 0
    %1147 = vmatpush1.bf16.msra.mxu0 0
    %1148 = vmatprep.subr.bf16.mxu0 0
    %1149 = vmatpush1.bf16.msra.mxu0 0
    %1150 = vmatprep.subr.bf16.mxu0 0
    %1151 = vmatpush1.bf16.msra.mxu0 0
    %1152 = vmatprep.subr.bf16.mxu0 0
    %1153 = vmatpush1.bf16.msra.mxu0 0
    %1154 = vmatprep.subr.bf16.mxu0 0
    %1155 = vmatpush1.bf16.msra.mxu0 0
    %1156 = vmatprep.subr.bf16.mxu0 0
    %1157 = vmatpush1.bf16.msra.mxu0 0
    %1158 = vmatprep.mubr.bf16.mxu0 0
    %1159 = vmatmul.mubr.bf16.gmra.mrb[0].mxu0 %v1124
    %v1160 = vpop.f32.mrb[0].mxu0
    %v1161 = vadd.f32 0.0, %v1160
    %v1162 = vpop.f32.mrb[0].mxu0
    %v1163 = vpop.f32.mrb[0].mxu0
    %v1164 = vpop.f32.mrb[0].mxu0
    %1165 = vdwg.mxu0
    %v1167 = vrot.slane %v1161, 5
    %v1168 = vrot.slane %v1161, 6
    %v1169 = vrot.slane %v1161, 7
    %v1170 = vrot.slane %v1161, 1
    %v1171 = vrot.slane %v1161, 2
    %v1172 = vrot.slane %v1161, 3
    %v1173 = vrot.slane %v1161, 4
    %v1182 = vadd.f32 %v143, %v1167
    %v1183 = vadd.f32 %v144, %v1168
    %v1184 = vadd.f32 %v145, %v1169
    %v1185 = vadd.f32 %v146, %v1161
    %v1186 = vadd.f32 %v147, %v1170
    %v1187 = vadd.f32 %v148, %v1171
    %v1188 = vadd.f32 %v149, %v1172
    %v1189 = vadd.f32 %v150, %v1173
    %v1190 = vxor.u32 %v1182, 2147483648
    %v1191 = vxor.u32 %v1183, 2147483648
    %v1192 = vxor.u32 %v1184, 2147483648
    %v1193 = vxor.u32 %v1185, 2147483648
    %v1194 = vxor.u32 %v1186, 2147483648
    %v1195 = vxor.u32 %v1187, 2147483648
    %v1196 = vxor.u32 %v1188, 2147483648
    %v1197 = vxor.u32 %v1189, 2147483648
    %v1198 = vmul.f32 %v1190, 1.442695
    %v1199 = vpow.pop %v1198
    %v1200 = vmul.f32 %v1191, 1.442695
    %v1201 = vpow.pop %v1200
    %v1202 = vmul.f32 %v1192, 1.442695
    %v1203 = vpow.pop %v1202
    %v1204 = vmul.f32 %v1193, 1.442695
    %v1205 = vpow.pop %v1204
    %v1206 = vmul.f32 %v1194, 1.442695
    %v1207 = vpow.pop %v1206
    %v1208 = vmul.f32 %v1195, 1.442695
    %v1209 = vpow.pop %v1208
    %v1210 = vmul.f32 %v1196, 1.442695
    %v1211 = vpow.pop %v1210
    %v1212 = vmul.f32 %v1197, 1.442695
    %v1213 = vpow.pop %v1212
    %v1214 = vadd.f32 %v1199, 1.0
    %v1215 = vadd.f32 %v1201, 1.0
    %v1216 = vadd.f32 %v1203, 1.0
    %v1217 = vadd.f32 %v1205, 1.0
    %v1218 = vadd.f32 %v1207, 1.0
    %v1219 = vadd.f32 %v1209, 1.0
    %v1220 = vadd.f32 %v1211, 1.0
    %v1221 = vadd.f32 %v1213, 1.0
    %v1222 = vrcp.pop %v1214
    %v1223 = vmul.f32 1.0, %v1222
    %v1224 = vrcp.pop %v1215
    %v1225 = vmul.f32 1.0, %v1224
    %v1226 = vrcp.pop %v1216
    %v1227 = vmul.f32 1.0, %v1226
    %v1228 = vrcp.pop %v1217
    %v1229 = vmul.f32 1.0, %v1228
    %v1230 = vrcp.pop %v1218
    %v1231 = vmul.f32 1.0, %v1230
    %v1232 = vrcp.pop %v1219
    %v1233 = vmul.f32 1.0, %v1232
    %v1234 = vrcp.pop %v1220
    %v1235 = vmul.f32 1.0, %v1234
    %v1236 = vrcp.pop %v1221
    %v1237 = vmul.f32 1.0, %v1236
    %v1238 = vtanh.pop %v1182
    %v1239 = vtanh.pop %v1183
    %v1240 = vtanh.pop %v1184
    %v1241 = vtanh.pop %v1185
    %v1242 = vtanh.pop %v1186
    %v1243 = vtanh.pop %v1187
    %v1244 = vtanh.pop %v1188
    %v1245 = vtanh.pop %v1189
    %v1254 = vrot.slane %v1026, 7
    %v1255 = vrot.slane %v1027, 7
    %v1256 = vrot.slane %v1028, 7
    %v1257 = vrot.slane %v1029, 7
    %v1258 = vrot.slane %v1030, 7
    %v1259 = vrot.slane %v1031, 7
    %v1260 = vrot.slane %v1032, 7
    %v1261 = vrot.slane %v1033, 7
    %v1270 = vmul.f32 %v1223, %v1254
    %v1271 = vmul.f32 %v1225, %v1255
    %v1272 = vmul.f32 %v1227, %v1256
    %v1273 = vmul.f32 %v1229, %v1257
    %v1274 = vmul.f32 %v1231, %v1258
    %v1275 = vmul.f32 %v1233, %v1259
    %v1276 = vmul.f32 %v1235, %v1260
    %v1277 = vmul.f32 %v1237, %v1261
    %1286 = vrot.lane.b32.xlu0 %v1238, 64
    %v1287 = vpop.permute.xlu0 %1286
    %1288 = vrot.lane.b32.xlu0 %v1239, 64
    %v1289 = vpop.permute.xlu0 %1288
    %1290 = vrot.lane.b32.xlu0 %v1240, 64
    %v1291 = vpop.permute.xlu0 %1290
    %1292 = vrot.lane.b32.xlu0 %v1241, 64
    %v1293 = vpop.permute.xlu0 %1292
    %1294 = vrot.lane.b32.xlu0 %v1242, 64
    %v1295 = vpop.permute.xlu0 %1294
    %1296 = vrot.lane.b32.xlu0 %v1243, 64
    %v1297 = vpop.permute.xlu0 %1296
    %1298 = vrot.lane.b32.xlu0 %v1244, 64
    %v1299 = vpop.permute.xlu0 %1298
    %1300 = vrot.lane.b32.xlu0 %v1245, 64
    %v1301 = vpop.permute.xlu0 %1300
    %v1310 = vmul.f32 %v1223, %v1287
    %v1311 = vmul.f32 %v1225, %v1289
    %v1312 = vmul.f32 %v1227, %v1291
    %v1313 = vmul.f32 %v1229, %v1293
    %v1314 = vmul.f32 %v1231, %v1295
    %v1315 = vmul.f32 %v1233, %v1297
    %v1316 = vmul.f32 %v1235, %v1299
    %v1317 = vmul.f32 %v1237, %v1301
    %1326 = vrot.lane.b32.xlu0 %v1310, 32
    %v1327 = vpop.permute.xlu0 %1326
    %1328 = vrot.lane.b32.xlu0 %v1311, 32
    %v1329 = vpop.permute.xlu0 %1328
    %1330 = vrot.lane.b32.xlu0 %v1312, 32
    %v1331 = vpop.permute.xlu0 %1330
    %1332 = vrot.lane.b32.xlu0 %v1313, 32
    %v1333 = vpop.permute.xlu0 %1332
    %1334 = vrot.lane.b32.xlu0 %v1314, 32
    %v1335 = vpop.permute.xlu0 %1334
    %1336 = vrot.lane.b32.xlu0 %v1315, 32
    %v1337 = vpop.permute.xlu0 %1336
    %1338 = vrot.lane.b32.xlu0 %v1316, 32
    %v1339 = vpop.permute.xlu0 %1338
    %1340 = vrot.lane.b32.xlu0 %v1317, 32
    %v1341 = vpop.permute.xlu0 %1340
    %v1350 = vadd.f32 %v1270, %v1327
    %v1351 = vadd.f32 %v1271, %v1329
    %v1352 = vadd.f32 %v1272, %v1331
    %v1353 = vadd.f32 %v1273, %v1333
    %v1354 = vadd.f32 %v1274, %v1335
    %v1355 = vadd.f32 %v1275, %v1337
    %v1356 = vadd.f32 %v1276, %v1339
    %v1357 = vadd.f32 %v1277, %v1341
    %v1358 = vtanh.pop %v1350
    %v1359 = vtanh.pop %v1351
    %v1360 = vtanh.pop %v1352
    %v1361 = vtanh.pop %v1353
    %v1362 = vtanh.pop %v1354
    %v1363 = vtanh.pop %v1355
    %v1364 = vtanh.pop %v1356
    %v1365 = vtanh.pop %v1357
    %1374 = vrot.lane.b32.xlu0 %v1358, 64
    %v1375 = vpop.permute.xlu0 %1374
    %1376 = vrot.lane.b32.xlu0 %v1359, 64
    %v1377 = vpop.permute.xlu0 %1376
    %1378 = vrot.lane.b32.xlu0 %v1360, 64
    %v1379 = vpop.permute.xlu0 %1378
    %1380 = vrot.lane.b32.xlu0 %v1361, 64
    %v1381 = vpop.permute.xlu0 %1380
    %1382 = vrot.lane.b32.xlu0 %v1362, 64
    %v1383 = vpop.permute.xlu0 %1382
    %1384 = vrot.lane.b32.xlu0 %v1363, 64
    %v1385 = vpop.permute.xlu0 %1384
    %1386 = vrot.lane.b32.xlu0 %v1364, 64
    %v1387 = vpop.permute.xlu0 %1386
    %1388 = vrot.lane.b32.xlu0 %v1365, 64
    %v1389 = vpop.permute.xlu0 %1388
    %v1398 = vmul.f32 %v1223, %v1375
    %v1399 = vmul.f32 %v1225, %v1377
    %v1400 = vmul.f32 %v1227, %v1379
    %v1401 = vmul.f32 %v1229, %v1381
    %v1402 = vmul.f32 %v1231, %v1383
    %v1403 = vmul.f32 %v1233, %v1385
    %v1404 = vmul.f32 %v1235, %v1387
    %v1405 = vmul.f32 %v1237, %v1389
    %v1406 = vpack.c.bf16 %v1398, %v1398
    %v1407 = vpack.c.bf16 %v1399, %v1399
    %v1408 = vpack.c.bf16 %v1400, %v1400
    %v1409 = vpack.c.bf16 %v1401, %v1401
    %v1410 = vpack.c.bf16 %v1402, %v1402
    %v1411 = vpack.c.bf16 %v1403, %v1403
    %v1412 = vpack.c.bf16 %v1404, %v1404
    %v1413 = vpack.c.bf16 %v1405, %v1405
    %v1422 = vunpack.c.l.b16 %v1406
    %v1423 = vunpack.c.l.b16 %v1407
    %v1424 = vunpack.c.l.b16 %v1408
    %v1425 = vunpack.c.l.b16 %v1409
    %v1426 = vunpack.c.l.b16 %v1410
    %v1427 = vunpack.c.l.b16 %v1411
    %v1428 = vunpack.c.l.b16 %v1412
    %v1429 = vunpack.c.l.b16 %v1413
    %v1430 = vrot.slane %v1422, 3
    %v1431 = vrot.slane %v1423, 2
    %v1432 = vsel %vm452, %v1431, %v1430
    %v1433 = vrot.slane %v1424, 1
    %v1434 = vsel %vm455, %v1433, %v1432
    %v1435 = vsel %vm458, %v1425, %v1434
    %v1436 = vrot.slane %v1426, 7
    %v1437 = vsel %vm461, %v1436, %v1435
    %v1438 = vrot.slane %v1427, 6
    %v1439 = vsel %vm464, %v1438, %v1437
    %v1440 = vrot.slane %v1428, 5
    %v1441 = vsel %vm467, %v1440, %v1439
    %v1442 = vrot.slane %v1429, 4
    %v1443 = vsel %vm470, %v1442, %v1441
    %v1444 = vpack.c.b16 %v1443, %v1443
    %1445 = vrot.lane.b32.xlu0 %v1444, 32
    %v1446 = vpop.permute.xlu0 %1445
    %v1448 = vsel %vm167, %v1446, 0
    %1450 = vmatprep.subr.bf16.mxu0 0
    %1451 = vmatpush1.bf16.msra.mxu0 %v163
    %1452 = vmatprep.subr.bf16.mxu0 0
    %1453 = vmatpush1.bf16.msra.mxu0 %v164
    %1454 = vmatprep.subr.bf16.mxu0 0
    %1455 = vmatpush1.bf16.msra.mxu0 0
    %1456 = vmatprep.subr.bf16.mxu0 0
    %1457 = vmatpush1.bf16.msra.mxu0 0
    %1458 = vmatprep.subr.bf16.mxu0 0
    %1459 = vmatpush1.bf16.msra.mxu0 0
    %1460 = vmatprep.subr.bf16.mxu0 0
    %1461 = vmatpush1.bf16.msra.mxu0 0
    %1462 = vmatprep.subr.bf16.mxu0 0
    %1463 = vmatpush1.bf16.msra.mxu0 0
    %1464 = vmatprep.subr.bf16.mxu0 0
    %1465 = vmatpush1.bf16.msra.mxu0 0
    %1466 = vmatprep.subr.bf16.mxu0 0
    %1467 = vmatpush1.bf16.msra.mxu0 0
    %1468 = vmatprep.subr.bf16.mxu0 0
    %1469 = vmatpush1.bf16.msra.mxu0 0
    %1470 = vmatprep.subr.bf16.mxu0 0
    %1471 = vmatpush1.bf16.msra.mxu0 0
    %1472 = vmatprep.subr.bf16.mxu0 0
    %1473 = vmatpush1.bf16.msra.mxu0 0
    %1474 = vmatprep.subr.bf16.mxu0 0
    %1475 = vmatpush1.bf16.msra.mxu0 0
    %1476 = vmatprep.subr.bf16.mxu0 0
    %1477 = vmatpush1.bf16.msra.mxu0 0
    %1478 = vmatprep.subr.bf16.mxu0 0
    %1479 = vmatpush1.bf16.msra.mxu0 0
    %1480 = vmatprep.subr.bf16.mxu0 0
    %1481 = vmatpush1.bf16.msra.mxu0 0
    %1482 = vmatprep.mubr.bf16.mxu0 0
    %1483 = vmatmul.mubr.bf16.gmra.mrb[0].mxu0 %v1448
    %v1484 = vpop.f32.mrb[0].mxu0
    %v1485 = vadd.f32 0.0, %v1484
    %v1486 = vpop.f32.mrb[0].mxu0
    %v1487 = vpop.f32.mrb[0].mxu0
    %v1488 = vpop.f32.mrb[0].mxu0
    %1489 = vdwg.mxu0
    %v1491 = vrot.slane %v1485, 4
    %v1492 = vrot.slane %v1485, 5
    %v1493 = vrot.slane %v1485, 6
    %v1494 = vrot.slane %v1485, 7
    %v1495 = vrot.slane %v1485, 1
    %v1496 = vrot.slane %v1485, 2
    %v1497 = vrot.slane %v1485, 3
    %v1506 = vadd.f32 %v143, %v1491
    %v1507 = vadd.f32 %v144, %v1492
    %v1508 = vadd.f32 %v145, %v1493
    %v1509 = vadd.f32 %v146, %v1494
    %v1510 = vadd.f32 %v147, %v1485
    %v1511 = vadd.f32 %v148, %v1495
    %v1512 = vadd.f32 %v149, %v1496
    %v1513 = vadd.f32 %v150, %v1497
    %v1514 = vxor.u32 %v1506, 2147483648
    %v1515 = vxor.u32 %v1507, 2147483648
    %v1516 = vxor.u32 %v1508, 2147483648
    %v1517 = vxor.u32 %v1509, 2147483648
    %v1518 = vxor.u32 %v1510, 2147483648
    %v1519 = vxor.u32 %v1511, 2147483648
    %v1520 = vxor.u32 %v1512, 2147483648
    %v1521 = vxor.u32 %v1513, 2147483648
    %v1522 = vmul.f32 %v1514, 1.442695
    %v1523 = vpow.pop %v1522
    %v1524 = vmul.f32 %v1515, 1.442695
    %v1525 = vpow.pop %v1524
    %v1526 = vmul.f32 %v1516, 1.442695
    %v1527 = vpow.pop %v1526
    %v1528 = vmul.f32 %v1517, 1.442695
    %v1529 = vpow.pop %v1528
    %v1530 = vmul.f32 %v1518, 1.442695
    %v1531 = vpow.pop %v1530
    %v1532 = vmul.f32 %v1519, 1.442695
    %v1533 = vpow.pop %v1532
    %v1534 = vmul.f32 %v1520, 1.442695
    %v1535 = vpow.pop %v1534
    %v1536 = vmul.f32 %v1521, 1.442695
    %v1537 = vpow.pop %v1536
    %v1538 = vadd.f32 %v1523, 1.0
    %v1539 = vadd.f32 %v1525, 1.0
    %v1540 = vadd.f32 %v1527, 1.0
    %v1541 = vadd.f32 %v1529, 1.0
    %v1542 = vadd.f32 %v1531, 1.0
    %v1543 = vadd.f32 %v1533, 1.0
    %v1544 = vadd.f32 %v1535, 1.0
    %v1545 = vadd.f32 %v1537, 1.0
    %v1546 = vrcp.pop %v1538
    %v1547 = vmul.f32 1.0, %v1546
    %v1548 = vrcp.pop %v1539
    %v1549 = vmul.f32 1.0, %v1548
    %v1550 = vrcp.pop %v1540
    %v1551 = vmul.f32 1.0, %v1550
    %v1552 = vrcp.pop %v1541
    %v1553 = vmul.f32 1.0, %v1552
    %v1554 = vrcp.pop %v1542
    %v1555 = vmul.f32 1.0, %v1554
    %v1556 = vrcp.pop %v1543
    %v1557 = vmul.f32 1.0, %v1556
    %v1558 = vrcp.pop %v1544
    %v1559 = vmul.f32 1.0, %v1558
    %v1560 = vrcp.pop %v1545
    %v1561 = vmul.f32 1.0, %v1560
    %v1562 = vtanh.pop %v1506
    %v1563 = vtanh.pop %v1507
    %v1564 = vtanh.pop %v1508
    %v1565 = vtanh.pop %v1509
    %v1566 = vtanh.pop %v1510
    %v1567 = vtanh.pop %v1511
    %v1568 = vtanh.pop %v1512
    %v1569 = vtanh.pop %v1513
    %v1578 = vrot.slane %v1350, 7
    %v1579 = vrot.slane %v1351, 7
    %v1580 = vrot.slane %v1352, 7
    %v1581 = vrot.slane %v1353, 7
    %v1582 = vrot.slane %v1354, 7
    %v1583 = vrot.slane %v1355, 7
    %v1584 = vrot.slane %v1356, 7
    %v1585 = vrot.slane %v1357, 7
    %v1594 = vmul.f32 %v1547, %v1578
    %v1595 = vmul.f32 %v1549, %v1579
    %v1596 = vmul.f32 %v1551, %v1580
    %v1597 = vmul.f32 %v1553, %v1581
    %v1598 = vmul.f32 %v1555, %v1582
    %v1599 = vmul.f32 %v1557, %v1583
    %v1600 = vmul.f32 %v1559, %v1584
    %v1601 = vmul.f32 %v1561, %v1585
    %1610 = vrot.lane.b32.xlu0 %v1562, 64
    %v1611 = vpop.permute.xlu0 %1610
    %1612 = vrot.lane.b32.xlu0 %v1563, 64
    %v1613 = vpop.permute.xlu0 %1612
    %1614 = vrot.lane.b32.xlu0 %v1564, 64
    %v1615 = vpop.permute.xlu0 %1614
    %1616 = vrot.lane.b32.xlu0 %v1565, 64
    %v1617 = vpop.permute.xlu0 %1616
    %1618 = vrot.lane.b32.xlu0 %v1566, 64
    %v1619 = vpop.permute.xlu0 %1618
    %1620 = vrot.lane.b32.xlu0 %v1567, 64
    %v1621 = vpop.permute.xlu0 %1620
    %1622 = vrot.lane.b32.xlu0 %v1568, 64
    %v1623 = vpop.permute.xlu0 %1622
    %1624 = vrot.lane.b32.xlu0 %v1569, 64
    %v1625 = vpop.permute.xlu0 %1624
    %v1634 = vmul.f32 %v1547, %v1611
    %v1635 = vmul.f32 %v1549, %v1613
    %v1636 = vmul.f32 %v1551, %v1615
    %v1637 = vmul.f32 %v1553, %v1617
    %v1638 = vmul.f32 %v1555, %v1619
    %v1639 = vmul.f32 %v1557, %v1621
    %v1640 = vmul.f32 %v1559, %v1623
    %v1641 = vmul.f32 %v1561, %v1625
    %1650 = vrot.lane.b32.xlu0 %v1634, 32
    %v1651 = vpop.permute.xlu0 %1650
    %1652 = vrot.lane.b32.xlu0 %v1635, 32
    %v1653 = vpop.permute.xlu0 %1652
    %1654 = vrot.lane.b32.xlu0 %v1636, 32
    %v1655 = vpop.permute.xlu0 %1654
    %1656 = vrot.lane.b32.xlu0 %v1637, 32
    %v1657 = vpop.permute.xlu0 %1656
    %1658 = vrot.lane.b32.xlu0 %v1638, 32
    %v1659 = vpop.permute.xlu0 %1658
    %1660 = vrot.lane.b32.xlu0 %v1639, 32
    %v1661 = vpop.permute.xlu0 %1660
    %1662 = vrot.lane.b32.xlu0 %v1640, 32
    %v1663 = vpop.permute.xlu0 %1662
    %1664 = vrot.lane.b32.xlu0 %v1641, 32
    %v1665 = vpop.permute.xlu0 %1664
    %v1674 = vadd.f32 %v1594, %v1651
    %v1675 = vadd.f32 %v1595, %v1653
    %v1676 = vadd.f32 %v1596, %v1655
    %v1677 = vadd.f32 %v1597, %v1657
    %v1678 = vadd.f32 %v1598, %v1659
    %v1679 = vadd.f32 %v1599, %v1661
    %v1680 = vadd.f32 %v1600, %v1663
    %v1681 = vadd.f32 %v1601, %v1665
    %v1682 = vtanh.pop %v1674
    %v1683 = vtanh.pop %v1675
    %v1684 = vtanh.pop %v1676
    %v1685 = vtanh.pop %v1677
    %v1686 = vtanh.pop %v1678
    %v1687 = vtanh.pop %v1679
    %v1688 = vtanh.pop %v1680
    %v1689 = vtanh.pop %v1681
    %1698 = vrot.lane.b32.xlu0 %v1682, 64
    %v1699 = vpop.permute.xlu0 %1698
    %1700 = vrot.lane.b32.xlu0 %v1683, 64
    %v1701 = vpop.permute.xlu0 %1700
    %1702 = vrot.lane.b32.xlu0 %v1684, 64
    %v1703 = vpop.permute.xlu0 %1702
    %1704 = vrot.lane.b32.xlu0 %v1685, 64
    %v1705 = vpop.permute.xlu0 %1704
    %1706 = vrot.lane.b32.xlu0 %v1686, 64
    %v1707 = vpop.permute.xlu0 %1706
    %1708 = vrot.lane.b32.xlu0 %v1687, 64
    %v1709 = vpop.permute.xlu0 %1708
    %1710 = vrot.lane.b32.xlu0 %v1688, 64
    %v1711 = vpop.permute.xlu0 %1710
    %1712 = vrot.lane.b32.xlu0 %v1689, 64
    %v1713 = vpop.permute.xlu0 %1712
    %v1722 = vmul.f32 %v1547, %v1699
    %v1723 = vmul.f32 %v1549, %v1701
    %v1724 = vmul.f32 %v1551, %v1703
    %v1725 = vmul.f32 %v1553, %v1705
    %v1726 = vmul.f32 %v1555, %v1707
    %v1727 = vmul.f32 %v1557, %v1709
    %v1728 = vmul.f32 %v1559, %v1711
    %v1729 = vmul.f32 %v1561, %v1713
    %v1730 = vpack.c.bf16 %v1722, %v1722
    %v1731 = vpack.c.bf16 %v1723, %v1723
    %v1732 = vpack.c.bf16 %v1724, %v1724
    %v1733 = vpack.c.bf16 %v1725, %v1725
    %v1734 = vpack.c.bf16 %v1726, %v1726
    %v1735 = vpack.c.bf16 %v1727, %v1727
    %v1736 = vpack.c.bf16 %v1728, %v1728
    %v1737 = vpack.c.bf16 %v1729, %v1729
    %v1746 = vunpack.c.l.b16 %v1730
    %v1747 = vunpack.c.l.b16 %v1731
    %v1748 = vunpack.c.l.b16 %v1732
    %v1749 = vunpack.c.l.b16 %v1733
    %v1750 = vunpack.c.l.b16 %v1734
    %v1751 = vunpack.c.l.b16 %v1735
    %v1752 = vunpack.c.l.b16 %v1736
    %v1753 = vunpack.c.l.b16 %v1737
    %v1754 = vrot.slane %v1746, 4
    %v1755 = vrot.slane %v1747, 3
    %v1756 = vsel %vm452, %v1755, %v1754
    %v1757 = vrot.slane %v1748, 2
    %v1758 = vsel %vm455, %v1757, %v1756
    %v1759 = vrot.slane %v1749, 1
    %v1760 = vsel %vm458, %v1759, %v1758
    %v1761 = vsel %vm461, %v1750, %v1760
    %v1762 = vrot.slane %v1751, 7
    %v1763 = vsel %vm464, %v1762, %v1761
    %v1764 = vrot.slane %v1752, 6
    %v1765 = vsel %vm467, %v1764, %v1763
    %v1766 = vrot.slane %v1753, 5
    %v1767 = vsel %vm470, %v1766, %v1765
    %v1768 = vpack.c.b16 %v1767, %v1767
    %1769 = vrot.lane.b32.xlu0 %v1768, 32
    %v1770 = vpop.permute.xlu0 %1769
    %v1772 = vsel %vm167, %v1770, 0
    %1774 = vmatprep.subr.bf16.mxu0 0
    %1775 = vmatpush1.bf16.msra.mxu0 %v163
    %1776 = vmatprep.subr.bf16.mxu0 0
    %1777 = vmatpush1.bf16.msra.mxu0 %v164
    %1778 = vmatprep.subr.bf16.mxu0 0
    %1779 = vmatpush1.bf16.msra.mxu0 0
    %1780 = vmatprep.subr.bf16.mxu0 0
    %1781 = vmatpush1.bf16.msra.mxu0 0
    %1782 = vmatprep.subr.bf16.mxu0 0
    %1783 = vmatpush1.bf16.msra.mxu0 0
    %1784 = vmatprep.subr.bf16.mxu0 0
    %1785 = vmatpush1.bf16.msra.mxu0 0
    %1786 = vmatprep.subr.bf16.mxu0 0
    %1787 = vmatpush1.bf16.msra.mxu0 0
    %1788 = vmatprep.subr.bf16.mxu0 0
    %1789 = vmatpush1.bf16.msra.mxu0 0
    %1790 = vmatprep.subr.bf16.mxu0 0
    %1791 = vmatpush1.bf16.msra.mxu0 0
    %1792 = vmatprep.subr.bf16.mxu0 0
    %1793 = vmatpush1.bf16.msra.mxu0 0
    %1794 = vmatprep.subr.bf16.mxu0 0
    %1795 = vmatpush1.bf16.msra.mxu0 0
    %1796 = vmatprep.subr.bf16.mxu0 0
    %1797 = vmatpush1.bf16.msra.mxu0 0
    %1798 = vmatprep.subr.bf16.mxu0 0
    %1799 = vmatpush1.bf16.msra.mxu0 0
    %1800 = vmatprep.subr.bf16.mxu0 0
    %1801 = vmatpush1.bf16.msra.mxu0 0
    %1802 = vmatprep.subr.bf16.mxu0 0
    %1803 = vmatpush1.bf16.msra.mxu0 0
    %1804 = vmatprep.subr.bf16.mxu0 0
    %1805 = vmatpush1.bf16.msra.mxu0 0
    %1806 = vmatprep.mubr.bf16.mxu0 0
    %1807 = vmatmul.mubr.bf16.gmra.mrb[0].mxu0 %v1772
    %v1808 = vpop.f32.mrb[0].mxu0
    %v1809 = vadd.f32 0.0, %v1808
    %v1810 = vpop.f32.mrb[0].mxu0
    %v1811 = vpop.f32.mrb[0].mxu0
    %v1812 = vpop.f32.mrb[0].mxu0
    %1813 = vdwg.mxu0
    %v1815 = vrot.slane %v1809, 3
    %v1816 = vrot.slane %v1809, 4
    %v1817 = vrot.slane %v1809, 5
    %v1818 = vrot.slane %v1809, 6
    %v1819 = vrot.slane %v1809, 7
    %v1820 = vrot.slane %v1809, 1
    %v1821 = vrot.slane %v1809, 2
    %v1830 = vadd.f32 %v143, %v1815
    %v1831 = vadd.f32 %v144, %v1816
    %v1832 = vadd.f32 %v145, %v1817
    %v1833 = vadd.f32 %v146, %v1818
    %v1834 = vadd.f32 %v147, %v1819
    %v1835 = vadd.f32 %v148, %v1809
    %v1836 = vadd.f32 %v149, %v1820
    %v1837 = vadd.f32 %v150, %v1821
    %v1838 = vxor.u32 %v1830, 2147483648
    %v1839 = vxor.u32 %v1831, 2147483648
    %v1840 = vxor.u32 %v1832, 2147483648
    %v1841 = vxor.u32 %v1833, 2147483648
    %v1842 = vxor.u32 %v1834, 2147483648
    %v1843 = vxor.u32 %v1835, 2147483648
    %v1844 = vxor.u32 %v1836, 2147483648
    %v1845 = vxor.u32 %v1837, 2147483648
    %v1846 = vmul.f32 %v1838, 1.442695
    %v1847 = vpow.pop %v1846
    %v1848 = vmul.f32 %v1839, 1.442695
    %v1849 = vpow.pop %v1848
    %v1850 = vmul.f32 %v1840, 1.442695
    %v1851 = vpow.pop %v1850
    %v1852 = vmul.f32 %v1841, 1.442695
    %v1853 = vpow.pop %v1852
    %v1854 = vmul.f32 %v1842, 1.442695
    %v1855 = vpow.pop %v1854
    %v1856 = vmul.f32 %v1843, 1.442695
    %v1857 = vpow.pop %v1856
    %v1858 = vmul.f32 %v1844, 1.442695
    %v1859 = vpow.pop %v1858
    %v1860 = vmul.f32 %v1845, 1.442695
    %v1861 = vpow.pop %v1860
    %v1862 = vadd.f32 %v1847, 1.0
    %v1863 = vadd.f32 %v1849, 1.0
    %v1864 = vadd.f32 %v1851, 1.0
    %v1865 = vadd.f32 %v1853, 1.0
    %v1866 = vadd.f32 %v1855, 1.0
    %v1867 = vadd.f32 %v1857, 1.0
    %v1868 = vadd.f32 %v1859, 1.0
    %v1869 = vadd.f32 %v1861, 1.0
    %v1870 = vrcp.pop %v1862
    %v1871 = vmul.f32 1.0, %v1870
    %v1872 = vrcp.pop %v1863
    %v1873 = vmul.f32 1.0, %v1872
    %v1874 = vrcp.pop %v1864
    %v1875 = vmul.f32 1.0, %v1874
    %v1876 = vrcp.pop %v1865
    %v1877 = vmul.f32 1.0, %v1876
    %v1878 = vrcp.pop %v1866
    %v1879 = vmul.f32 1.0, %v1878
    %v1880 = vrcp.pop %v1867
    %v1881 = vmul.f32 1.0, %v1880
    %v1882 = vrcp.pop %v1868
    %v1883 = vmul.f32 1.0, %v1882
    %v1884 = vrcp.pop %v1869
    %v1885 = vmul.f32 1.0, %v1884
    %v1886 = vtanh.pop %v1830
    %v1887 = vtanh.pop %v1831
    %v1888 = vtanh.pop %v1832
    %v1889 = vtanh.pop %v1833
    %v1890 = vtanh.pop %v1834
    %v1891 = vtanh.pop %v1835
    %v1892 = vtanh.pop %v1836
    %v1893 = vtanh.pop %v1837
    %v1902 = vrot.slane %v1674, 7
    %v1903 = vrot.slane %v1675, 7
    %v1904 = vrot.slane %v1676, 7
    %v1905 = vrot.slane %v1677, 7
    %v1906 = vrot.slane %v1678, 7
    %v1907 = vrot.slane %v1679, 7
    %v1908 = vrot.slane %v1680, 7
    %v1909 = vrot.slane %v1681, 7
    %v1918 = vmul.f32 %v1871, %v1902
    %v1919 = vmul.f32 %v1873, %v1903
    %v1920 = vmul.f32 %v1875, %v1904
    %v1921 = vmul.f32 %v1877, %v1905
    %v1922 = vmul.f32 %v1879, %v1906
    %v1923 = vmul.f32 %v1881, %v1907
    %v1924 = vmul.f32 %v1883, %v1908
    %v1925 = vmul.f32 %v1885, %v1909
    %1934 = vrot.lane.b32.xlu0 %v1886, 64
    %v1935 = vpop.permute.xlu0 %1934
    %1936 = vrot.lane.b32.xlu0 %v1887, 64
    %v1937 = vpop.permute.xlu0 %1936
    %1938 = vrot.lane.b32.xlu0 %v1888, 64
    %v1939 = vpop.permute.xlu0 %1938
    %1940 = vrot.lane.b32.xlu0 %v1889, 64
    %v1941 = vpop.permute.xlu0 %1940
    %1942 = vrot.lane.b32.xlu0 %v1890, 64
    %v1943 = vpop.permute.xlu0 %1942
    %1944 = vrot.lane.b32.xlu0 %v1891, 64
    %v1945 = vpop.permute.xlu0 %1944
    %1946 = vrot.lane.b32.xlu0 %v1892, 64
    %v1947 = vpop.permute.xlu0 %1946
    %1948 = vrot.lane.b32.xlu0 %v1893, 64
    %v1949 = vpop.permute.xlu0 %1948
    %v1958 = vmul.f32 %v1871, %v1935
    %v1959 = vmul.f32 %v1873, %v1937
    %v1960 = vmul.f32 %v1875, %v1939
    %v1961 = vmul.f32 %v1877, %v1941
    %v1962 = vmul.f32 %v1879, %v1943
    %v1963 = vmul.f32 %v1881, %v1945
    %v1964 = vmul.f32 %v1883, %v1947
    %v1965 = vmul.f32 %v1885, %v1949
    %1974 = vrot.lane.b32.xlu0 %v1958, 32
    %v1975 = vpop.permute.xlu0 %1974
    %1976 = vrot.lane.b32.xlu0 %v1959, 32
    %v1977 = vpop.permute.xlu0 %1976
    %1978 = vrot.lane.b32.xlu0 %v1960, 32
    %v1979 = vpop.permute.xlu0 %1978
    %1980 = vrot.lane.b32.xlu0 %v1961, 32
    %v1981 = vpop.permute.xlu0 %1980
    %1982 = vrot.lane.b32.xlu0 %v1962, 32
    %v1983 = vpop.permute.xlu0 %1982
    %1984 = vrot.lane.b32.xlu0 %v1963, 32
    %v1985 = vpop.permute.xlu0 %1984
    %1986 = vrot.lane.b32.xlu0 %v1964, 32
    %v1987 = vpop.permute.xlu0 %1986
    %1988 = vrot.lane.b32.xlu0 %v1965, 32
    %v1989 = vpop.permute.xlu0 %1988
    %v1998 = vadd.f32 %v1918, %v1975
    %v1999 = vadd.f32 %v1919, %v1977
    %v2000 = vadd.f32 %v1920, %v1979
    %v2001 = vadd.f32 %v1921, %v1981
    %v2002 = vadd.f32 %v1922, %v1983
    %v2003 = vadd.f32 %v1923, %v1985
    %v2004 = vadd.f32 %v1924, %v1987
    %v2005 = vadd.f32 %v1925, %v1989
    %v2006 = vtanh.pop %v1998
    %v2007 = vtanh.pop %v1999
    %v2008 = vtanh.pop %v2000
    %v2009 = vtanh.pop %v2001
    %v2010 = vtanh.pop %v2002
    %v2011 = vtanh.pop %v2003
    %v2012 = vtanh.pop %v2004
    %v2013 = vtanh.pop %v2005
    %2022 = vrot.lane.b32.xlu0 %v2006, 64
    %v2023 = vpop.permute.xlu0 %2022
    %2024 = vrot.lane.b32.xlu0 %v2007, 64
    %v2025 = vpop.permute.xlu0 %2024
    %2026 = vrot.lane.b32.xlu0 %v2008, 64
    %v2027 = vpop.permute.xlu0 %2026
    %2028 = vrot.lane.b32.xlu0 %v2009, 64
    %v2029 = vpop.permute.xlu0 %2028
    %2030 = vrot.lane.b32.xlu0 %v2010, 64
    %v2031 = vpop.permute.xlu0 %2030
    %2032 = vrot.lane.b32.xlu0 %v2011, 64
    %v2033 = vpop.permute.xlu0 %2032
    %2034 = vrot.lane.b32.xlu0 %v2012, 64
    %v2035 = vpop.permute.xlu0 %2034
    %2036 = vrot.lane.b32.xlu0 %v2013, 64
    %v2037 = vpop.permute.xlu0 %2036
    %v2046 = vmul.f32 %v1871, %v2023
    %v2047 = vmul.f32 %v1873, %v2025
    %v2048 = vmul.f32 %v1875, %v2027
    %v2049 = vmul.f32 %v1877, %v2029
    %v2050 = vmul.f32 %v1879, %v2031
    %v2051 = vmul.f32 %v1881, %v2033
    %v2052 = vmul.f32 %v1883, %v2035
    %v2053 = vmul.f32 %v1885, %v2037
    %v2054 = vpack.c.bf16 %v2046, %v2046
    %v2055 = vpack.c.bf16 %v2047, %v2047
    %v2056 = vpack.c.bf16 %v2048, %v2048
    %v2057 = vpack.c.bf16 %v2049, %v2049
    %v2058 = vpack.c.bf16 %v2050, %v2050
    %v2059 = vpack.c.bf16 %v2051, %v2051
    %v2060 = vpack.c.bf16 %v2052, %v2052
    %v2061 = vpack.c.bf16 %v2053, %v2053
    %v2070 = vunpack.c.l.b16 %v2054
    %v2071 = vunpack.c.l.b16 %v2055
    %v2072 = vunpack.c.l.b16 %v2056
    %v2073 = vunpack.c.l.b16 %v2057
    %v2074 = vunpack.c.l.b16 %v2058
    %v2075 = vunpack.c.l.b16 %v2059
    %v2076 = vunpack.c.l.b16 %v2060
    %v2077 = vunpack.c.l.b16 %v2061
    %v2078 = vrot.slane %v2070, 5
    %v2079 = vrot.slane %v2071, 4
    %v2080 = vsel %vm452, %v2079, %v2078
    %v2081 = vrot.slane %v2072, 3
    %v2082 = vsel %vm455, %v2081, %v2080
    %v2083 = vrot.slane %v2073, 2
    %v2084 = vsel %vm458, %v2083, %v2082
    %v2085 = vrot.slane %v2074, 1
    %v2086 = vsel %vm461, %v2085, %v2084
    %v2087 = vsel %vm464, %v2075, %v2086
    %v2088 = vrot.slane %v2076, 7
    %v2089 = vsel %vm467, %v2088, %v2087
    %v2090 = vrot.slane %v2077, 6
    %v2091 = vsel %vm470, %v2090, %v2089
    %v2092 = vpack.c.b16 %v2091, %v2091
    %2093 = vrot.lane.b32.xlu0 %v2092, 32
    %v2094 = vpop.permute.xlu0 %2093
    %v2096 = vsel %vm167, %v2094, 0
    %2098 = vmatprep.subr.bf16.mxu0 0
    %2099 = vmatpush1.bf16.msra.mxu0 %v163
    %2100 = vmatprep.subr.bf16.mxu0 0
    %2101 = vmatpush1.bf16.msra.mxu0 %v164
    %2102 = vmatprep.subr.bf16.mxu0 0
    %2103 = vmatpush1.bf16.msra.mxu0 0
    %2104 = vmatprep.subr.bf16.mxu0 0
    %2105 = vmatpush1.bf16.msra.mxu0 0
    %2106 = vmatprep.subr.bf16.mxu0 0
    %2107 = vmatpush1.bf16.msra.mxu0 0
    %2108 = vmatprep.subr.bf16.mxu0 0
    %2109 = vmatpush1.bf16.msra.mxu0 0
    %2110 = vmatprep.subr.bf16.mxu0 0
    %2111 = vmatpush1.bf16.msra.mxu0 0
    %2112 = vmatprep.subr.bf16.mxu0 0
    %2113 = vmatpush1.bf16.msra.mxu0 0
    %2114 = vmatprep.subr.bf16.mxu0 0
    %2115 = vmatpush1.bf16.msra.mxu0 0
    %2116 = vmatprep.subr.bf16.mxu0 0
    %2117 = vmatpush1.bf16.msra.mxu0 0
    %2118 = vmatprep.subr.bf16.mxu0 0
    %2119 = vmatpush1.bf16.msra.mxu0 0
    %2120 = vmatprep.subr.bf16.mxu0 0
    %2121 = vmatpush1.bf16.msra.mxu0 0
    %2122 = vmatprep.subr.bf16.mxu0 0
    %2123 = vmatpush1.bf16.msra.mxu0 0
    %2124 = vmatprep.subr.bf16.mxu0 0
    %2125 = vmatpush1.bf16.msra.mxu0 0
    %2126 = vmatprep.subr.bf16.mxu0 0
    %2127 = vmatpush1.bf16.msra.mxu0 0
    %2128 = vmatprep.subr.bf16.mxu0 0
    %2129 = vmatpush1.bf16.msra.mxu0 0
    %2130 = vmatprep.mubr.bf16.mxu0 0
    %2131 = vmatmul.mubr.bf16.gmra.mrb[0].mxu0 %v2096
    %v2132 = vpop.f32.mrb[0].mxu0
    %v2133 = vadd.f32 0.0, %v2132
    %v2134 = vpop.f32.mrb[0].mxu0
    %v2135 = vpop.f32.mrb[0].mxu0
    %v2136 = vpop.f32.mrb[0].mxu0
    %2137 = vdwg.mxu0
    %v2139 = vrot.slane %v2133, 2
    %v2140 = vrot.slane %v2133, 3
    %v2141 = vrot.slane %v2133, 4
    %v2142 = vrot.slane %v2133, 5
    %v2143 = vrot.slane %v2133, 6
    %v2144 = vrot.slane %v2133, 7
    %v2145 = vrot.slane %v2133, 1
    %v2154 = vadd.f32 %v143, %v2139
    %v2155 = vadd.f32 %v144, %v2140
    %v2156 = vadd.f32 %v145, %v2141
    %v2157 = vadd.f32 %v146, %v2142
    %v2158 = vadd.f32 %v147, %v2143
    %v2159 = vadd.f32 %v148, %v2144
    %v2160 = vadd.f32 %v149, %v2133
    %v2161 = vadd.f32 %v150, %v2145
    %v2162 = vxor.u32 %v2154, 2147483648
    %v2163 = vxor.u32 %v2155, 2147483648
    %v2164 = vxor.u32 %v2156, 2147483648
    %v2165 = vxor.u32 %v2157, 2147483648
    %v2166 = vxor.u32 %v2158, 2147483648
    %v2167 = vxor.u32 %v2159, 2147483648
    %v2168 = vxor.u32 %v2160, 2147483648
    %v2169 = vxor.u32 %v2161, 2147483648
    %v2170 = vmul.f32 %v2162, 1.442695
    %v2171 = vpow.pop %v2170
    %v2172 = vmul.f32 %v2163, 1.442695
    %v2173 = vpow.pop %v2172
    %v2174 = vmul.f32 %v2164, 1.442695
    %v2175 = vpow.pop %v2174
    %v2176 = vmul.f32 %v2165, 1.442695
    %v2177 = vpow.pop %v2176
    %v2178 = vmul.f32 %v2166, 1.442695
    %v2179 = vpow.pop %v2178
    %v2180 = vmul.f32 %v2167, 1.442695
    %v2181 = vpow.pop %v2180
    %v2182 = vmul.f32 %v2168, 1.442695
    %v2183 = vpow.pop %v2182
    %v2184 = vmul.f32 %v2169, 1.442695
    %v2185 = vpow.pop %v2184
    %v2186 = vadd.f32 %v2171, 1.0
    %v2187 = vadd.f32 %v2173, 1.0
    %v2188 = vadd.f32 %v2175, 1.0
    %v2189 = vadd.f32 %v2177, 1.0
    %v2190 = vadd.f32 %v2179, 1.0
    %v2191 = vadd.f32 %v2181, 1.0
    %v2192 = vadd.f32 %v2183, 1.0
    %v2193 = vadd.f32 %v2185, 1.0
    %v2194 = vrcp.pop %v2186
    %v2195 = vmul.f32 1.0, %v2194
    %v2196 = vrcp.pop %v2187
    %v2197 = vmul.f32 1.0, %v2196
    %v2198 = vrcp.pop %v2188
    %v2199 = vmul.f32 1.0, %v2198
    %v2200 = vrcp.pop %v2189
    %v2201 = vmul.f32 1.0, %v2200
    %v2202 = vrcp.pop %v2190
    %v2203 = vmul.f32 1.0, %v2202
    %v2204 = vrcp.pop %v2191
    %v2205 = vmul.f32 1.0, %v2204
    %v2206 = vrcp.pop %v2192
    %v2207 = vmul.f32 1.0, %v2206
    %v2208 = vrcp.pop %v2193
    %v2209 = vmul.f32 1.0, %v2208
    %v2210 = vtanh.pop %v2154
    %v2211 = vtanh.pop %v2155
    %v2212 = vtanh.pop %v2156
    %v2213 = vtanh.pop %v2157
    %v2214 = vtanh.pop %v2158
    %v2215 = vtanh.pop %v2159
    %v2216 = vtanh.pop %v2160
    %v2217 = vtanh.pop %v2161
    %v2226 = vrot.slane %v1998, 7
    %v2227 = vrot.slane %v1999, 7
    %v2228 = vrot.slane %v2000, 7
    %v2229 = vrot.slane %v2001, 7
    %v2230 = vrot.slane %v2002, 7
    %v2231 = vrot.slane %v2003, 7
    %v2232 = vrot.slane %v2004, 7
    %v2233 = vrot.slane %v2005, 7
    %v2242 = vmul.f32 %v2195, %v2226
    %v2243 = vmul.f32 %v2197, %v2227
    %v2244 = vmul.f32 %v2199, %v2228
    %v2245 = vmul.f32 %v2201, %v2229
    %v2246 = vmul.f32 %v2203, %v2230
    %v2247 = vmul.f32 %v2205, %v2231
    %v2248 = vmul.f32 %v2207, %v2232
    %v2249 = vmul.f32 %v2209, %v2233
    %2258 = vrot.lane.b32.xlu0 %v2210, 64
    %v2259 = vpop.permute.xlu0 %2258
    %2260 = vrot.lane.b32.xlu0 %v2211, 64
    %v2261 = vpop.permute.xlu0 %2260
    %2262 = vrot.lane.b32.xlu0 %v2212, 64
    %v2263 = vpop.permute.xlu0 %2262
    %2264 = vrot.lane.b32.xlu0 %v2213, 64
    %v2265 = vpop.permute.xlu0 %2264
    %2266 = vrot.lane.b32.xlu0 %v2214, 64
    %v2267 = vpop.permute.xlu0 %2266
    %2268 = vrot.lane.b32.xlu0 %v2215, 64
    %v2269 = vpop.permute.xlu0 %2268
    %2270 = vrot.lane.b32.xlu0 %v2216, 64
    %v2271 = vpop.permute.xlu0 %2270
    %2272 = vrot.lane.b32.xlu0 %v2217, 64
    %v2273 = vpop.permute.xlu0 %2272
    %v2282 = vmul.f32 %v2195, %v2259
    %v2283 = vmul.f32 %v2197, %v2261
    %v2284 = vmul.f32 %v2199, %v2263
    %v2285 = vmul.f32 %v2201, %v2265
    %v2286 = vmul.f32 %v2203, %v2267
    %v2287 = vmul.f32 %v2205, %v2269
    %v2288 = vmul.f32 %v2207, %v2271
    %v2289 = vmul.f32 %v2209, %v2273
    %2298 = vrot.lane.b32.xlu0 %v2282, 32
    %v2299 = vpop.permute.xlu0 %2298
    %2300 = vrot.lane.b32.xlu0 %v2283, 32
    %v2301 = vpop.permute.xlu0 %2300
    %2302 = vrot.lane.b32.xlu0 %v2284, 32
    %v2303 = vpop.permute.xlu0 %2302
    %2304 = vrot.lane.b32.xlu0 %v2285, 32
    %v2305 = vpop.permute.xlu0 %2304
    %2306 = vrot.lane.b32.xlu0 %v2286, 32
    %v2307 = vpop.permute.xlu0 %2306
    %2308 = vrot.lane.b32.xlu0 %v2287, 32
    %v2309 = vpop.permute.xlu0 %2308
    %2310 = vrot.lane.b32.xlu0 %v2288, 32
    %v2311 = vpop.permute.xlu0 %2310
    %2312 = vrot.lane.b32.xlu0 %v2289, 32
    %v2313 = vpop.permute.xlu0 %2312
    %v2322 = vadd.f32 %v2242, %v2299
    %v2323 = vadd.f32 %v2243, %v2301
    %v2324 = vadd.f32 %v2244, %v2303
    %v2325 = vadd.f32 %v2245, %v2305
    %v2326 = vadd.f32 %v2246, %v2307
    %v2327 = vadd.f32 %v2247, %v2309
    %v2328 = vadd.f32 %v2248, %v2311
    %v2329 = vadd.f32 %v2249, %v2313
    %v2330 = vtanh.pop %v2322
    %v2331 = vtanh.pop %v2323
    %v2332 = vtanh.pop %v2324
    %v2333 = vtanh.pop %v2325
    %v2334 = vtanh.pop %v2326
    %v2335 = vtanh.pop %v2327
    %v2336 = vtanh.pop %v2328
    %v2337 = vtanh.pop %v2329
    %2346 = vrot.lane.b32.xlu0 %v2330, 64
    %v2347 = vpop.permute.xlu0 %2346
    %2348 = vrot.lane.b32.xlu0 %v2331, 64
    %v2349 = vpop.permute.xlu0 %2348
    %2350 = vrot.lane.b32.xlu0 %v2332, 64
    %v2351 = vpop.permute.xlu0 %2350
    %2352 = vrot.lane.b32.xlu0 %v2333, 64
    %v2353 = vpop.permute.xlu0 %2352
    %2354 = vrot.lane.b32.xlu0 %v2334, 64
    %v2355 = vpop.permute.xlu0 %2354
    %2356 = vrot.lane.b32.xlu0 %v2335, 64
    %v2357 = vpop.permute.xlu0 %2356
    %2358 = vrot.lane.b32.xlu0 %v2336, 64
    %v2359 = vpop.permute.xlu0 %2358
    %2360 = vrot.lane.b32.xlu0 %v2337, 64
    %v2361 = vpop.permute.xlu0 %2360
    %v2370 = vmul.f32 %v2195, %v2347
    %v2371 = vmul.f32 %v2197, %v2349
    %v2372 = vmul.f32 %v2199, %v2351
    %v2373 = vmul.f32 %v2201, %v2353
    %v2374 = vmul.f32 %v2203, %v2355
    %v2375 = vmul.f32 %v2205, %v2357
    %v2376 = vmul.f32 %v2207, %v2359
    %v2377 = vmul.f32 %v2209, %v2361
    %v2378 = vpack.c.bf16 %v2370, %v2370
    %v2379 = vpack.c.bf16 %v2371, %v2371
    %v2380 = vpack.c.bf16 %v2372, %v2372
    %v2381 = vpack.c.bf16 %v2373, %v2373
    %v2382 = vpack.c.bf16 %v2374, %v2374
    %v2383 = vpack.c.bf16 %v2375, %v2375
    %v2384 = vpack.c.bf16 %v2376, %v2376
    %v2385 = vpack.c.bf16 %v2377, %v2377
    %v2394 = vunpack.c.l.b16 %v2378
    %v2395 = vunpack.c.l.b16 %v2379
    %v2396 = vunpack.c.l.b16 %v2380
    %v2397 = vunpack.c.l.b16 %v2381
    %v2398 = vunpack.c.l.b16 %v2382
    %v2399 = vunpack.c.l.b16 %v2383
    %v2400 = vunpack.c.l.b16 %v2384
    %v2401 = vunpack.c.l.b16 %v2385
    %v2402 = vrot.slane %v2394, 6
    %v2403 = vrot.slane %v2395, 5
    %v2404 = vsel %vm452, %v2403, %v2402
    %v2405 = vrot.slane %v2396, 4
    %v2406 = vsel %vm455, %v2405, %v2404
    %v2407 = vrot.slane %v2397, 3
    %v2408 = vsel %vm458, %v2407, %v2406
    %v2409 = vrot.slane %v2398, 2
    %v2410 = vsel %vm461, %v2409, %v2408
    %v2411 = vrot.slane %v2399, 1
    %v2412 = vsel %vm464, %v2411, %v2410
    %v2413 = vsel %vm467, %v2400, %v2412
    %v2414 = vrot.slane %v2401, 7
    %v2415 = vsel %vm470, %v2414, %v2413
    %v2416 = vpack.c.b16 %v2415, %v2415
    %2417 = vrot.lane.b32.xlu0 %v2416, 32
    %v2418 = vpop.permute.xlu0 %2417
    %v2420 = vsel %vm167, %v2418, 0
    %2422 = vmatprep.subr.bf16.mxu0 0
    %2423 = vmatpush1.bf16.msra.mxu0 %v163
    %2424 = vmatprep.subr.bf16.mxu0 0
    %2425 = vmatpush1.bf16.msra.mxu0 %v164
    %2426 = vmatprep.subr.bf16.mxu0 0
    %2427 = vmatpush1.bf16.msra.mxu0 0
    %2428 = vmatprep.subr.bf16.mxu0 0
    %2429 = vmatpush1.bf16.msra.mxu0 0
    %2430 = vmatprep.subr.bf16.mxu0 0
    %2431 = vmatpush1.bf16.msra.mxu0 0
    %2432 = vmatprep.subr.bf16.mxu0 0
    %2433 = vmatpush1.bf16.msra.mxu0 0
    %2434 = vmatprep.subr.bf16.mxu0 0
    %2435 = vmatpush1.bf16.msra.mxu0 0
    %2436 = vmatprep.subr.bf16.mxu0 0
    %2437 = vmatpush1.bf16.msra.mxu0 0
    %2438 = vmatprep.subr.bf16.mxu0 0
    %2439 = vmatpush1.bf16.msra.mxu0 0
    %2440 = vmatprep.subr.bf16.mxu0 0
    %2441 = vmatpush1.bf16.msra.mxu0 0
    %2442 = vmatprep.subr.bf16.mxu0 0
    %2443 = vmatpush1.bf16.msra.mxu0 0
    %2444 = vmatprep.subr.bf16.mxu0 0
    %2445 = vmatpush1.bf16.msra.mxu0 0
    %2446 = vmatprep.subr.bf16.mxu0 0
    %2447 = vmatpush1.bf16.msra.mxu0 0
    %2448 = vmatprep.subr.bf16.mxu0 0
    %2449 = vmatpush1.bf16.msra.mxu0 0
    %2450 = vmatprep.subr.bf16.mxu0 0
    %2451 = vmatpush1.bf16.msra.mxu0 0
    %2452 = vmatprep.subr.bf16.mxu0 0
    %2453 = vmatpush1.bf16.msra.mxu0 0
    %2454 = vmatprep.mubr.bf16.mxu0 0
    %2455 = vmatmul.mubr.bf16.gmra.mrb[0].mxu0 %v2420
    %v2456 = vpop.f32.mrb[0].mxu0
    %v2457 = vadd.f32 0.0, %v2456
    %v2458 = vpop.f32.mrb[0].mxu0
    %v2459 = vpop.f32.mrb[0].mxu0
    %v2460 = vpop.f32.mrb[0].mxu0
    %2461 = vdwg.mxu0
    %v2463 = vrot.slane %v2457, 1
    %v2464 = vrot.slane %v2457, 2
    %v2465 = vrot.slane %v2457, 3
    %v2466 = vrot.slane %v2457, 4
    %v2467 = vrot.slane %v2457, 5
    %v2468 = vrot.slane %v2457, 6
    %v2469 = vrot.slane %v2457, 7
    %v2478 = vadd.f32 %v143, %v2463
    %v2479 = vadd.f32 %v144, %v2464
    %v2480 = vadd.f32 %v145, %v2465
    %v2481 = vadd.f32 %v146, %v2466
    %v2482 = vadd.f32 %v147, %v2467
    %v2483 = vadd.f32 %v148, %v2468
    %v2484 = vadd.f32 %v149, %v2469
    %v2485 = vadd.f32 %v150, %v2457
    %v2486 = vxor.u32 %v2478, 2147483648
    %v2487 = vxor.u32 %v2479, 2147483648
    %v2488 = vxor.u32 %v2480, 2147483648
    %v2489 = vxor.u32 %v2481, 2147483648
    %v2490 = vxor.u32 %v2482, 2147483648
    %v2491 = vxor.u32 %v2483, 2147483648
    %v2492 = vxor.u32 %v2484, 2147483648
    %v2493 = vxor.u32 %v2485, 2147483648
    %v2494 = vmul.f32 %v2486, 1.442695
    %v2495 = vpow.pop %v2494
    %v2496 = vmul.f32 %v2487, 1.442695
    %v2497 = vpow.pop %v2496
    %v2498 = vmul.f32 %v2488, 1.442695
    %v2499 = vpow.pop %v2498
    %v2500 = vmul.f32 %v2489, 1.442695
    %v2501 = vpow.pop %v2500
    %v2502 = vmul.f32 %v2490, 1.442695
    %v2503 = vpow.pop %v2502
    %v2504 = vmul.f32 %v2491, 1.442695
    %v2505 = vpow.pop %v2504
    %v2506 = vmul.f32 %v2492, 1.442695
    %v2507 = vpow.pop %v2506
    %v2508 = vmul.f32 %v2493, 1.442695
    %v2509 = vpow.pop %v2508
    %v2510 = vadd.f32 %v2495, 1.0
    %v2511 = vadd.f32 %v2497, 1.0
    %v2512 = vadd.f32 %v2499, 1.0
    %v2513 = vadd.f32 %v2501, 1.0
    %v2514 = vadd.f32 %v2503, 1.0
    %v2515 = vadd.f32 %v2505, 1.0
    %v2516 = vadd.f32 %v2507, 1.0
    %v2517 = vadd.f32 %v2509, 1.0
    %v2518 = vrcp.pop %v2510
    %v2519 = vmul.f32 1.0, %v2518
    %v2520 = vrcp.pop %v2511
    %v2521 = vmul.f32 1.0, %v2520
    %v2522 = vrcp.pop %v2512
    %v2523 = vmul.f32 1.0, %v2522
    %v2524 = vrcp.pop %v2513
    %v2525 = vmul.f32 1.0, %v2524
    %v2526 = vrcp.pop %v2514
    %v2527 = vmul.f32 1.0, %v2526
    %v2528 = vrcp.pop %v2515
    %v2529 = vmul.f32 1.0, %v2528
    %v2530 = vrcp.pop %v2516
    %v2531 = vmul.f32 1.0, %v2530
    %v2532 = vrcp.pop %v2517
    %v2533 = vmul.f32 1.0, %v2532
    %v2534 = vtanh.pop %v2478
    %v2535 = vtanh.pop %v2479
    %v2536 = vtanh.pop %v2480
    %v2537 = vtanh.pop %v2481
    %v2538 = vtanh.pop %v2482
    %v2539 = vtanh.pop %v2483
    %v2540 = vtanh.pop %v2484
    %v2541 = vtanh.pop %v2485
    %v2550 = vrot.slane %v2322, 7
    %v2551 = vrot.slane %v2323, 7
    %v2552 = vrot.slane %v2324, 7
    %v2553 = vrot.slane %v2325, 7
    %v2554 = vrot.slane %v2326, 7
    %v2555 = vrot.slane %v2327, 7
    %v2556 = vrot.slane %v2328, 7
    %v2557 = vrot.slane %v2329, 7
    %v2566 = vmul.f32 %v2519, %v2550
    %v2567 = vmul.f32 %v2521, %v2551
    %v2568 = vmul.f32 %v2523, %v2552
    %v2569 = vmul.f32 %v2525, %v2553
    %v2570 = vmul.f32 %v2527, %v2554
    %v2571 = vmul.f32 %v2529, %v2555
    %v2572 = vmul.f32 %v2531, %v2556
    %v2573 = vmul.f32 %v2533, %v2557
    %2582 = vrot.lane.b32.xlu0 %v2534, 64
    %v2583 = vpop.permute.xlu0 %2582
    %2584 = vrot.lane.b32.xlu0 %v2535, 64
    %v2585 = vpop.permute.xlu0 %2584
    %2586 = vrot.lane.b32.xlu0 %v2536, 64
    %v2587 = vpop.permute.xlu0 %2586
    %2588 = vrot.lane.b32.xlu0 %v2537, 64
    %v2589 = vpop.permute.xlu0 %2588
    %2590 = vrot.lane.b32.xlu0 %v2538, 64
    %v2591 = vpop.permute.xlu0 %2590
    %2592 = vrot.lane.b32.xlu0 %v2539, 64
    %v2593 = vpop.permute.xlu0 %2592
    %2594 = vrot.lane.b32.xlu0 %v2540, 64
    %v2595 = vpop.permute.xlu0 %2594
    %2596 = vrot.lane.b32.xlu0 %v2541, 64
    %v2597 = vpop.permute.xlu0 %2596
    %v2606 = vmul.f32 %v2519, %v2583
    %v2607 = vmul.f32 %v2521, %v2585
    %v2608 = vmul.f32 %v2523, %v2587
    %v2609 = vmul.f32 %v2525, %v2589
    %v2610 = vmul.f32 %v2527, %v2591
    %v2611 = vmul.f32 %v2529, %v2593
    %v2612 = vmul.f32 %v2531, %v2595
    %v2613 = vmul.f32 %v2533, %v2597
    %2622 = vrot.lane.b32.xlu0 %v2606, 32
    %v2623 = vpop.permute.xlu0 %2622
    %2624 = vrot.lane.b32.xlu0 %v2607, 32
    %v2625 = vpop.permute.xlu0 %2624
    %2626 = vrot.lane.b32.xlu0 %v2608, 32
    %v2627 = vpop.permute.xlu0 %2626
    %2628 = vrot.lane.b32.xlu0 %v2609, 32
    %v2629 = vpop.permute.xlu0 %2628
    %2630 = vrot.lane.b32.xlu0 %v2610, 32
    %v2631 = vpop.permute.xlu0 %2630
    %2632 = vrot.lane.b32.xlu0 %v2611, 32
    %v2633 = vpop.permute.xlu0 %2632
    %2634 = vrot.lane.b32.xlu0 %v2612, 32
    %v2635 = vpop.permute.xlu0 %2634
    %2636 = vrot.lane.b32.xlu0 %v2613, 32
    %v2637 = vpop.permute.xlu0 %2636
    %v2646 = vadd.f32 %v2566, %v2623
    %v2647 = vadd.f32 %v2567, %v2625
    %v2648 = vadd.f32 %v2568, %v2627
    %v2649 = vadd.f32 %v2569, %v2629
    %v2650 = vadd.f32 %v2570, %v2631
    %v2651 = vadd.f32 %v2571, %v2633
    %v2652 = vadd.f32 %v2572, %v2635
    %v2653 = vadd.f32 %v2573, %v2637
    %v2654 = vtanh.pop %v2646
    %v2655 = vtanh.pop %v2647
    %v2656 = vtanh.pop %v2648
    %v2657 = vtanh.pop %v2649
    %v2658 = vtanh.pop %v2650
    %v2659 = vtanh.pop %v2651
    %v2660 = vtanh.pop %v2652
    %v2661 = vtanh.pop %v2653
    %2670 = vrot.lane.b32.xlu0 %v2654, 64
    %v2671 = vpop.permute.xlu0 %2670
    %2672 = vrot.lane.b32.xlu0 %v2655, 64
    %v2673 = vpop.permute.xlu0 %2672
    %2674 = vrot.lane.b32.xlu0 %v2656, 64
    %v2675 = vpop.permute.xlu0 %2674
    %2676 = vrot.lane.b32.xlu0 %v2657, 64
    %v2677 = vpop.permute.xlu0 %2676
    %2678 = vrot.lane.b32.xlu0 %v2658, 64
    %v2679 = vpop.permute.xlu0 %2678
    %2680 = vrot.lane.b32.xlu0 %v2659, 64
    %v2681 = vpop.permute.xlu0 %2680
    %2682 = vrot.lane.b32.xlu0 %v2660, 64
    %v2683 = vpop.permute.xlu0 %2682
    %2684 = vrot.lane.b32.xlu0 %v2661, 64
    %v2685 = vpop.permute.xlu0 %2684
    %v2694 = vmul.f32 %v2519, %v2671
    %v2695 = vmul.f32 %v2521, %v2673
    %v2696 = vmul.f32 %v2523, %v2675
    %v2697 = vmul.f32 %v2525, %v2677
    %v2698 = vmul.f32 %v2527, %v2679
    %v2699 = vmul.f32 %v2529, %v2681
    %v2700 = vmul.f32 %v2531, %v2683
    %v2701 = vmul.f32 %v2533, %v2685
    %v2702 = vpack.c.bf16 %v2694, %v2694
    %v2703 = vpack.c.bf16 %v2695, %v2695
    %v2704 = vpack.c.bf16 %v2696, %v2696
    %v2705 = vpack.c.bf16 %v2697, %v2697
    %v2706 = vpack.c.bf16 %v2698, %v2698
    %v2707 = vpack.c.bf16 %v2699, %v2699
    %v2708 = vpack.c.bf16 %v2700, %v2700
    %v2709 = vpack.c.bf16 %v2701, %v2701
    %v2710 = vld [vmem:[%s4] sm:$0xf]
    %v2711 = vld [vmem:[%s4 + $0x4] sm:$0xf]
    %v2712 = vld [vmem:[%s4 + $0x8] sm:$0xf]
    %v2713 = vld [vmem:[%s4 + $0xc] sm:$0xf]
    %v2714 = vld [vmem:[%s5] sm:$0x1]
    %v2716 = vlaneseq
    %v2717 = vshrl.u32 %v2716, 7
    %v2718 = vsub.s32 0, %v2717
    %v2719 = vrot.slane %v2714, %v2718
    %v2729 = vunpack.c.l.b16 %v2702
    %v2730 = vunpack.c.l.b16 %v2703
    %v2731 = vunpack.c.l.b16 %v2704
    %v2732 = vunpack.c.l.b16 %v2705
    %v2733 = vunpack.c.l.b16 %v2706
    %v2734 = vunpack.c.l.b16 %v2707
    %v2735 = vunpack.c.l.b16 %v2708
    %v2736 = vunpack.c.l.b16 %v2709
    %v2737 = vrot.slane %v2729, 7
    %v2738 = vrot.slane %v2730, 6
    %v2739 = vsel %vm452, %v2738, %v2737
    %v2740 = vrot.slane %v2731, 5
    %v2741 = vsel %vm455, %v2740, %v2739
    %v2742 = vrot.slane %v2732, 4
    %v2743 = vsel %vm458, %v2742, %v2741
    %v2744 = vrot.slane %v2733, 3
    %v2745 = vsel %vm461, %v2744, %v2743
    %v2746 = vrot.slane %v2734, 2
    %v2747 = vsel %vm464, %v2746, %v2745
    %v2748 = vrot.slane %v2735, 1
    %v2749 = vsel %vm467, %v2748, %v2747
    %v2750 = vsel %vm470, %v2736, %v2749
    %v2751 = vpack.c.b16 %v2750, %v2750
    %2752 = vrot.lane.b32.xlu0 %v2751, 32
    %v2753 = vpop.permute.xlu0 %2752
    %v2758 = vunpack.c.l.b16 %v2710
    %v2759 = vunpack.c.l.b16 %v2711
    %v2760 = vunpack.c.l.b16 %v2712
    %v2761 = vunpack.c.l.b16 %v2713
    %v2762 = vpack.c.b16 %v2759, %v2758
    %v2763 = vpack.c.b16 %v2761, %v2760
    %v2767 = vsel %vm167, %v2753, 0
    %2769 = vmatprep.subr.bf16.mxu0 0
    %2770 = vmatpush1.bf16.msra.mxu0 %v2762
    %2771 = vmatprep.subr.bf16.mxu0 0
    %2772 = vmatpush1.bf16.msra.mxu0 %v2763
    %2773 = vmatprep.subr.bf16.mxu0 0
    %2774 = vmatpush1.bf16.msra.mxu0 0
    %2775 = vmatprep.subr.bf16.mxu0 0
    %2776 = vmatpush1.bf16.msra.mxu0 0
    %2777 = vmatprep.subr.bf16.mxu0 0
    %2778 = vmatpush1.bf16.msra.mxu0 0
    %2779 = vmatprep.subr.bf16.mxu0 0
    %2780 = vmatpush1.bf16.msra.mxu0 0
    %2781 = vmatprep.subr.bf16.mxu0 0
    %2782 = vmatpush1.bf16.msra.mxu0 0
    %2783 = vmatprep.subr.bf16.mxu0 0
    %2784 = vmatpush1.bf16.msra.mxu0 0
    %2785 = vmatprep.subr.bf16.mxu0 0
    %2786 = vmatpush1.bf16.msra.mxu0 0
    %2787 = vmatprep.subr.bf16.mxu0 0
    %2788 = vmatpush1.bf16.msra.mxu0 0
    %2789 = vmatprep.subr.bf16.mxu0 0
    %2790 = vmatpush1.bf16.msra.mxu0 0
    %2791 = vmatprep.subr.bf16.mxu0 0
    %2792 = vmatpush1.bf16.msra.mxu0 0
    %2793 = vmatprep.subr.bf16.mxu0 0
    %2794 = vmatpush1.bf16.msra.mxu0 0
    %2795 = vmatprep.subr.bf16.mxu0 0
    %2796 = vmatpush1.bf16.msra.mxu0 0
    %2797 = vmatprep.subr.bf16.mxu0 0
    %2798 = vmatpush1.bf16.msra.mxu0 0
    %2799 = vmatprep.subr.bf16.mxu0 0
    %2800 = vmatpush1.bf16.msra.mxu0 0
    %2801 = vmatprep.mubr.bf16.mxu0 0
    %2802 = vmatmul.mubr.bf16.gmra.mrb[0].mxu0 %v2767
    %v2803 = vpop.f32.mrb[0].mxu0
    %v2804 = vadd.f32 %v2719, %v2803
    %v2805 = vpop.f32.mrb[0].mxu0
    %v2806 = vpop.f32.mrb[0].mxu0
    %v2807 = vpop.f32.mrb[0].mxu0
    %2808 = vdwg.mxu0
    %vm2809 = vcmask 64512
    %2810 = vst.msk [vmem:[#allocation2] sm:$0xff] %vm2809, %v2804
    // Predicated region
    $region26: #{tpu_custom_call.1} parent=1 // pred_check
      _
    $region27: #{tpu_custom_call.1} parent=1 // pred_check_branch
      %2812 = sbr.rel (0) target = $region29
    $region28: #{tpu_custom_call.1} parent=1 // pred_region
      %s2814 = ssub.s32 128, 128
      %2815 = vsyncadd [#allocation3], %s2814
      %s2817 = sshll.u32 [#allocation2], 4
      %s2818 = int_to_ptr.vmem [resolvable:$true] %s2817
      %2820 = dma.vmem_to_hbm [thread:$0]  %s2818, 128, %s6, [#allocation3]
    $region29: #{tpu_custom_call.1} parent=1 // pred_fallthru
      _
    // Predicated region
    $region30: #{tpu_custom_call.1} parent=1 // pred_check
      _
    $region31: #{tpu_custom_call.1} parent=1 // pred_check_branch
      %2822 = sbr.rel (0) target = $region33
    $region32: #{tpu_custom_call.1} parent=1 // pred_region
      %2823 = dma.done [#allocation3], 128
    $region33: #{tpu_custom_call.1} parent=1 // pred_fallthru
      _
    %2824 = vsyncpa [#allocation3], 1

</llo_original>
